<compile_context>
chip_gen: v7x
topology: tpu7x:2x2x1
jax: 0.10.0
libtpu: 0.0.40
codegen_flags: <defaults>
</compile_context>

<pallas_src>
import functools

import jax
import jax.numpy as jnp
import numpy as np
from jax.experimental import pallas as pl
from jax.experimental.pallas import tpu as pltpu


def _sigmoid(z):
    return 1.0 / (1.0 + jnp.exp(-z))


# ----------------------------------------------------------------------------
# 1. Generic linear kernel: y = x @ W.T + b  (optional fused sigmoid)
#    Tiled over the output-feature dimension so large N (e.g. vocab) pipelines.
# ----------------------------------------------------------------------------
def _linear_kernel(x_ref, wt_ref, b_ref, o_ref, *, activation):
    y = jnp.dot(x_ref[...], wt_ref[...], preferred_element_type=jnp.float32)
    y = y + b_ref[...]
    if activation == "sigmoid":
        y = _sigmoid(y)
    elif activation == "tanh":
        y = jnp.tanh(y)
    o_ref[...] = y.astype(o_ref.dtype)


def linear(x, w, b=None, activation=None, tile_n=512):
    """x: (M, K), w: (N, K) torch-style, b: (N,) -> (M, N)."""
    M, K = x.shape
    N = w.shape[0]
    wt = jnp.transpose(w)  # (K, N)
    if b is None:
        b = jnp.zeros((N,), x.dtype)
    tn = N if N <= tile_n else tile_n  # tile_n is 128-aligned for large N
    n_pad = pl.cdiv(N, tn) * tn
    if n_pad != N:
        wt = jnp.pad(wt, ((0, 0), (0, n_pad - N)))
        b = jnp.pad(b, (0, n_pad - N))
    b2 = b.reshape(1, n_pad).astype(x.dtype)

    out = pl.pallas_call(
        functools.partial(_linear_kernel, activation=activation),
        out_shape=jax.ShapeDtypeStruct((M, n_pad), x.dtype),
        grid=(n_pad // tn,),
        in_specs=[
            pl.BlockSpec((M, K), lambda j: (0, 0)),
            pl.BlockSpec((K, tn), lambda j: (0, j)),
            pl.BlockSpec((1, tn), lambda j: (0, j)),
        ],
        out_specs=pl.BlockSpec((M, tn), lambda j: (0, j)),
        compiler_params=pltpu.CompilerParams(
            dimension_semantics=("parallel",)),
    )(x, wt, b2)
    return out[:, :N] if n_pad != N else out


# ----------------------------------------------------------------------------
# 2. Embedding lookup via scalar-prefetch gather.
# ----------------------------------------------------------------------------
def _embed_kernel(ids_ref, emb_ref, o_ref):
    del ids_ref  # only used by the index_map
    o_ref[...] = emb_ref[...]


def embedding_lookup(emb, ids):
    """emb: (V, E), ids: (B,) int -> (B, E)."""
    V, E = emb.shape
    B = ids.shape[0]
    emb3 = emb.reshape(V, 1, E)
    out = pl.pallas_call(
        _embed_kernel,
        out_shape=jax.ShapeDtypeStruct((B, 1, E), emb.dtype),
        grid_spec=pltpu.PrefetchScalarGridSpec(
            num_scalar_prefetch=1,
            grid=(B,),
            in_specs=[pl.BlockSpec((1, 1, E), lambda b, ids_p: (ids_p[b], 0, 0))],
            out_specs=pl.BlockSpec((1, 1, E), lambda b, ids_p: (b, 0, 0)),
        ),
        compiler_params=pltpu.CompilerParams(
            dimension_semantics=("arbitrary",)),
    )(ids.astype(jnp.int32), emb3)
    return out.reshape(B, E)


# ----------------------------------------------------------------------------
# 3. LSTM cell step (PyTorch gate order: i, f, g, o).
# ----------------------------------------------------------------------------
def _lstm_cell_kernel(x_ref, h_ref, c_ref, wih_ref, whh_ref, b_ref,
                      hn_ref, cn_ref, *, hidden):
    gates = (jnp.dot(x_ref[...], wih_ref[...], preferred_element_type=jnp.float32)
             + jnp.dot(h_ref[...], whh_ref[...], preferred_element_type=jnp.float32)
             + b_ref[...])
    i = _sigmoid(gates[:, 0:hidden])
    f = _sigmoid(gates[:, hidden:2 * hidden])
    g = jnp.tanh(gates[:, 2 * hidden:3 * hidden])
    o = _sigmoid(gates[:, 3 * hidden:4 * hidden])
    c_new = f * c_ref[...] + i * g
    h_new = o * jnp.tanh(c_new)
    cn_ref[...] = c_new.astype(cn_ref.dtype)
    hn_ref[...] = h_new.astype(hn_ref.dtype)


def lstm_cell(x, h, c, w_ih, w_hh, b_ih, b_hh):
    B, E = x.shape
    H = h.shape[1]
    wih_t = jnp.transpose(w_ih)   # (E, 4H)
    whh_t = jnp.transpose(w_hh)   # (H, 4H)
    b = (b_ih + b_hh).reshape(1, 4 * H).astype(x.dtype)
    h_new, c_new = pl.pallas_call(
        functools.partial(_lstm_cell_kernel, hidden=H),
        out_shape=(jax.ShapeDtypeStruct((B, H), x.dtype),
                   jax.ShapeDtypeStruct((B, H), x.dtype)),
        grid=(1,),
        in_specs=[
            pl.BlockSpec((B, E), lambda i: (0, 0)),
            pl.BlockSpec((B, H), lambda i: (0, 0)),
            pl.BlockSpec((B, H), lambda i: (0, 0)),
            pl.BlockSpec((E, 4 * H), lambda i: (0, 0)),
            pl.BlockSpec((H, 4 * H), lambda i: (0, 0)),
            pl.BlockSpec((1, 4 * H), lambda i: (0, 0)),
        ],
        out_specs=(pl.BlockSpec((B, H), lambda i: (0, 0)),
                   pl.BlockSpec((B, H), lambda i: (0, 0))),
        compiler_params=pltpu.CompilerParams(
            dimension_semantics=("arbitrary",)),
    )(x, h, c, wih_t, whh_t, b)
    return h_new, c_new


# ----------------------------------------------------------------------------
# 4. Coverage attention, fused per batch row (grid over batch, "parallel").
# ----------------------------------------------------------------------------
def _attention_kernel(dec_ref, ef_ref, eo_ref, wc_ref, v_ref, mask_ref, cov_ref,
                      ct_ref, attn_ref, covn_ref, *, eps):
    ef = ef_ref[0]           # (T, 2H) encoder_feature
    eo = eo_ref[0]           # (T, 2H) encoder_outputs
    dec = dec_ref[0]         # (1, 2H) decode_proj(s_t_hat)
    wc = wc_ref[...]         # (1, 2H) coverage projection vector
    v = v_ref[...]           # (1, 2H) scoring vector
    mask = mask_ref[0]       # (T, 1)
    cov = cov_ref[0]         # (T, 1)

    att = ef + dec + cov * wc                         # (T, 2H)
    e = jnp.tanh(att)
    scores = jnp.sum(e * v, axis=1, keepdims=True)    # (T, 1)

    m = jnp.max(scores, axis=0, keepdims=True)
    p = jnp.exp(scores - m)
    sm = p / jnp.sum(p, axis=0, keepdims=True)        # softmax over T
    attn_masked = sm * mask
    norm = jnp.sum(attn_masked, axis=0, keepdims=True)
    attn = attn_masked / (norm + eps)                 # (T, 1)

    c_t = jnp.sum(attn * eo, axis=0, keepdims=True)   # (1, 2H)

    ct_ref[...] = c_t[None].astype(ct_ref.dtype)
    attn_ref[...] = attn[None].astype(attn_ref.dtype)
    covn_ref[...] = (cov + attn)[None].astype(covn_ref.dtype)


def attention_pallas(dec_fea, enc_out, enc_feat_3d, w_c_row, v_row,
                     mask, coverage, eps=1e-12):
    B, T, N2 = enc_out.shape
    dec3 = dec_fea.reshape(B, 1, N2)
    mask3 = mask.astype(enc_out.dtype).reshape(B, T, 1)
    cov3 = coverage.astype(enc_out.dtype).reshape(B, T, 1)

    c_t, attn, covn = pl.pallas_call(
        functools.partial(_attention_kernel, eps=eps),
        out_shape=(jax.ShapeDtypeStruct((B, 1, N2), enc_out.dtype),
                   jax.ShapeDtypeStruct((B, T, 1), enc_out.dtype),
                   jax.ShapeDtypeStruct((B, T, 1), enc_out.dtype)),
        grid=(B,),
        in_specs=[
            pl.BlockSpec((1, 1, N2), lambda b: (b, 0, 0)),
            pl.BlockSpec((1, T, N2), lambda b: (b, 0, 0)),
            pl.BlockSpec((1, T, N2), lambda b: (b, 0, 0)),
            pl.BlockSpec((1, N2), lambda b: (0, 0)),
            pl.BlockSpec((1, N2), lambda b: (0, 0)),
            pl.BlockSpec((1, T, 1), lambda b: (b, 0, 0)),
            pl.BlockSpec((1, T, 1), lambda b: (b, 0, 0)),
        ],
        out_specs=(pl.BlockSpec((1, 1, N2), lambda b: (b, 0, 0)),
                   pl.BlockSpec((1, T, 1), lambda b: (b, 0, 0)),
                   pl.BlockSpec((1, T, 1), lambda b: (b, 0, 0))),
        compiler_params=pltpu.CompilerParams(
            dimension_semantics=("parallel",)),
    )(dec3, enc_feat_3d, enc_out, w_c_row, v_row, mask3, cov3)
    return c_t.reshape(B, N2), attn.reshape(B, T), covn.reshape(B, T)


# ----------------------------------------------------------------------------
# 5. Pointer-generator final distribution:
#    softmax(logits) mixed with p_gen and scatter-add of attention (one-hot).
# ----------------------------------------------------------------------------
def _final_dist_kernel(logits_ref, pgen_ref, attn_ref, ids_ref, out_ref):
    logits = logits_ref[...]                              # (B, V)
    m = jnp.max(logits, axis=1, keepdims=True)
    ex = jnp.exp(logits - m)
    vocab_dist = ex / jnp.sum(ex, axis=1, keepdims=True)  # (B, V)

    pgen = pgen_ref[...]                                  # (B, 1)
    attn_w = attn_ref[...] * (1.0 - pgen)                 # (B, T)
    ids = ids_ref[...]                                    # (B, T) int32

    B, T = attn_w.shape
    V = logits.shape[1]
    iota_v = jax.lax.broadcasted_iota(jnp.int32, (B, T, V), 2)
    onehot = (iota_v == ids[:, :, None]).astype(logits.dtype)      # (B, T, V)
    scattered = jnp.sum(attn_w[:, :, None] * onehot, axis=1)       # (B, V)

    out_ref[...] = (pgen * vocab_dist + scattered).astype(out_ref.dtype)


def pointer_final_dist(logits, p_gen, attn_dist, ext_ids):
    B, V = logits.shape
    T = attn_dist.shape[1]
    return pl.pallas_call(
        _final_dist_kernel,
        out_shape=jax.ShapeDtypeStruct((B, V), logits.dtype),
        grid=(1,),
        in_specs=[
            pl.BlockSpec((B, V), lambda i: (0, 0)),
            pl.BlockSpec((B, 1), lambda i: (0, 0)),
            pl.BlockSpec((B, T), lambda i: (0, 0)),
            pl.BlockSpec((B, T), lambda i: (0, 0)),
        ],
        out_specs=pl.BlockSpec((B, V), lambda i: (0, 0)),
        compiler_params=pltpu.CompilerParams(
            dimension_semantics=("arbitrary",)),
    )(logits, p_gen, attn_dist, ext_ids.astype(jnp.int32))


# ----------------------------------------------------------------------------
# Decoder forward (mirrors Decoder.forward in the PyTorch spec).
# ----------------------------------------------------------------------------
@functools.partial(jax.jit, static_argnames=("cur_step", "training", "pointer_gen"))
def decoder_forward(params, y_t_1, s_t_1, c_t_1, encoder_outputs, encoder_feature,
                    mask_select, enc_batch_extend_vocab, coverage,
                    cur_step=0, training=True, pointer_gen=True):
    B, T, N2 = encoder_outputs.shape
    H = N2 // 2
    enc_feat_3d = encoder_feature.reshape(B, T, N2)
    w_c_row = params["W_c_w"].reshape(1, N2)
    v_row = params["v_w"].reshape(1, N2)

    def attention(s_t_hat, cov):
        dec_fea = linear(s_t_hat, params["decode_proj_w"], params["decode_proj_b"])
        return attention_pallas(dec_fea, encoder_outputs, enc_feat_3d,
                                w_c_row, v_row, mask_select, cov)

    if (not training) and cur_step == 0:
        h_d, c_d = s_t_1
        s_t_hat0 = jnp.concatenate([h_d.reshape(-1, H), c_d.reshape(-1, H)], axis=1)
        _, _, cov_next0 = attention(s_t_hat0, coverage)
        coverage = cov_next0

    y_embd = embedding_lookup(params["embedding"], y_t_1.reshape(-1))
    x = linear(jnp.concatenate([c_t_1, y_embd], axis=1),
               params["x_context_w"], params["x_context_b"])

    h_prev = s_t_1[0].reshape(B, H)
    c_prev = s_t_1[1].reshape(B, H)
    h_new, c_new = lstm_cell(x, h_prev, c_prev,
                             params["lstm_w_ih"], params["lstm_w_hh"],
                             params["lstm_b_ih"], params["lstm_b_hh"])
    lstm_out = h_new
    s_t = (h_new.reshape(1, B, H), c_new.reshape(1, B, H))
    s_t_hat = jnp.concatenate([h_new, c_new], axis=1)

    c_t, attn_dist, cov_next = attention(s_t_hat, coverage)
    if training or cur_step > 0:
        coverage = cov_next

    p_gen = None
    if pointer_gen:
        p_gen_input = jnp.concatenate([c_t, s_t_hat, x], axis=1)
        p_gen = linear(p_gen_input, params["p_gen_w"], params["p_gen_b"],
                       activation="sigmoid")

    output = linear(jnp.concatenate([lstm_out, c_t], axis=1),
                    params["out1_w"], params["out1_b"])
    logits = linear(output, params["out2_w"], params["out2_b"])

    if pointer_gen:
        final_dist = pointer_final_dist(logits, p_gen, attn_dist,
                                        enc_batch_extend_vocab)
    else:
        final_dist = jax.nn.softmax(logits, axis=1)

    return final_dist, s_t, c_t, attn_dist, p_gen, coverage


# ----------------------------------------------------------------------------
# Pure-JAX reference (mirrors the PyTorch forward exactly), for validation.
# ----------------------------------------------------------------------------
def decoder_reference(params, y_t_1, s_t_1, c_t_1, enc_out, enc_feat, mask,
                      ext_ids, coverage, cur_step=0, training=True,
                      pointer_gen=True):
    eps = 1e-12
    B, T, N2 = enc_out.shape
    H = N2 // 2

    def lin(x, w, b=None):
        y = x @ w.T
        return y if b is None else y + b

    def attention(s_t_hat, cov):
        dec_fea = lin(s_t_hat, params["decode_proj_w"], params["decode_proj_b"])
        dec_exp = jnp.broadcast_to(dec_fea[:, None, :], (B, T, N2)).reshape(-1, N2)
        att = enc_feat + dec_exp
        cov_feat = lin(cov.reshape(-1, 1), params["W_c_w"])
        att = att + cov_feat
        e = jnp.tanh(att)
        scores = lin(e, params["v_w"]).reshape(B, T)
        attn_ = jax.nn.softmax(scores, axis=1) * mask
        norm = attn_.sum(1, keepdims=True)
        attn = attn_ / (norm + eps)
        c_t = jnp.einsum("bt,btn->bn", attn, enc_out)
        cov_next = cov.reshape(B, T) + attn
        return c_t, attn, cov_next

    if (not training) and cur_step == 0:
        h_d, c_d = s_t_1
        s_t_hat0 = jnp.concatenate([h_d.reshape(-1, H), c_d.reshape(-1, H)], 1)
        _, _, cov_next0 = attention(s_t_hat0, coverage)
        coverage = cov_next0

    y_embd = params["embedding"][y_t_1.reshape(-1)]
    x = lin(jnp.concatenate([c_t_1, y_embd], 1),
            params["x_context_w"], params["x_context_b"])
    h_prev = s_t_1[0].reshape(B, H)
    c_prev = s_t_1[1].reshape(B, H)
    gates = (x @ params["lstm_w_ih"].T + h_prev @ params["lstm_w_hh"].T
             + params["lstm_b_ih"] + params["lstm_b_hh"])
    i = jax.nn.sigmoid(gates[:, :H])
    f = jax.nn.sigmoid(gates[:, H:2 * H])
    g = jnp.tanh(gates[:, 2 * H:3 * H])
    o = jax.nn.sigmoid(gates[:, 3 * H:])
    c_new = f * c_prev + i * g
    h_new = o * jnp.tanh(c_new)
    lstm_out = h_new
    s_t = (h_new.reshape(1, B, H), c_new.reshape(1, B, H))
    s_t_hat = jnp.concatenate([h_new, c_new], 1)

    c_t, attn_dist, cov_next = attention(s_t_hat, coverage)
    if training or cur_step > 0:
        coverage = cov_next

    p_gen = None
    if pointer_gen:
        p_gen_input = jnp.concatenate([c_t, s_t_hat, x], 1)
        p_gen = jax.nn.sigmoid(lin(p_gen_input, params["p_gen_w"], params["p_gen_b"]))

    output = lin(jnp.concatenate([lstm_out, c_t], 1),
                 params["out1_w"], params["out1_b"])
    logits = lin(output, params["out2_w"], params["out2_b"])
    vocab_dist = jax.nn.softmax(logits, axis=1)
    if pointer_gen:
        final = p_gen * vocab_dist
        final = final.at[jnp.arange(B)[:, None], ext_ids].add((1 - p_gen) * attn_dist)
    else:
        final = vocab_dist
    return final, s_t, c_t, attn_dist, p_gen, coverage


# ----------------------------------------------------------------------------
if __name__ == "__main__":
    B, T, H, E, V = 2, 8, 32, 16, 50  # batch, enc-len, hidden, emb, vocab

    key = jax.random.PRNGKey(0)
    ks = jax.random.split(key, 32)

    def init(k, shape, scale=0.1):
        return jax.random.normal(k, shape, jnp.float32) * scale

    params = {
        "embedding":     init(ks[0], (V, E), 0.1),
        "x_context_w":   init(ks[1], (E, 2 * H + E)),
        "x_context_b":   init(ks[2], (E,), 0.01),
        "lstm_w_ih":     init(ks[3], (4 * H, E)),
        "lstm_w_hh":     init(ks[4], (4 * H, H)),
        "lstm_b_ih":     init(ks[5], (4 * H,), 0.01),
        "lstm_b_hh":     init(ks[6], (4 * H,), 0.01),
        "decode_proj_w": init(ks[7], (2 * H, 2 * H)),
        "decode_proj_b": init(ks[8], (2 * H,), 0.01),
        "W_c_w":         init(ks[9], (2 * H, 1)),
        "v_w":           init(ks[10], (1, 2 * H)),
        "p_gen_w":       init(ks[11], (1, 4 * H + E)),
        "p_gen_b":       init(ks[12], (1,), 0.01),
        "out1_w":        init(ks[13], (H, 3 * H)),
        "out1_b":        init(ks[14], (H,), 0.01),
        "out2_w":        init(ks[15], (V, H)),
        "out2_b":        init(ks[16], (V,), 0.01),
    }

    y_t_1 = jax.random.randint(ks[17], (B, 1), 0, V)
    s_t_1 = (init(ks[18], (1, B, H), 0.2), init(ks[19], (1, B, H), 0.2))
    c_t_1 = init(ks[20], (B, 2 * H), 0.2)
    encoder_outputs = init(ks[21], (B, T, 2 * H), 0.5)
    encoder_feature = init(ks[22], (B * T, 2 * H), 0.5)
    mask_select = jnp.ones((B, T), jnp.float32).at[1, T - 2:].set(0.0)
    enc_batch_extend_vocab = jax.random.randint(ks[23], (B, T), 0, V)
    coverage = jnp.zeros((B, T), jnp.float32)

    out = decoder_forward(params, y_t_1, s_t_1, c_t_1, encoder_outputs,
                          encoder_feature, mask_select, enc_batch_extend_vocab,
                          coverage, cur_step=0, training=True, pointer_gen=True)
    out = jax.block_until_ready(out)
    final_dist, s_t, c_t, attn_dist, p_gen, cov_out = out

    ref = decoder_reference(params, y_t_1, s_t_1, c_t_1, encoder_outputs,
                            encoder_feature, mask_select, enc_batch_extend_vocab,
                            coverage, cur_step=0, training=True, pointer_gen=True)
    ref_final, ref_s_t, ref_c_t, ref_attn, ref_pgen, ref_cov = ref

    np.testing.assert_allclose(np.asarray(final_dist), np.asarray(ref_final),
                               rtol=1e-5, atol=1e-5)
    np.testing.assert_allclose(np.asarray(c_t), np.asarray(ref_c_t),
                               rtol=1e-5, atol=1e-5)
    np.testing.assert_allclose(np.asarray(attn_dist), np.asarray(ref_attn),
                               rtol=1e-5, atol=1e-5)
    np.testing.assert_allclose(np.asarray(p_gen), np.asarray(ref_pgen),
                               rtol=1e-5, atol=1e-5)
    np.testing.assert_allclose(np.asarray(cov_out), np.asarray(ref_cov),
                               rtol=1e-5, atol=1e-5)
    np.testing.assert_allclose(np.asarray(s_t[0]), np.asarray(ref_s_t[0]),
                               rtol=1e-5, atol=1e-5)
    np.testing.assert_allclose(np.asarray(s_t[1]), np.asarray(ref_s_t[1]),
                               rtol=1e-5, atol=1e-5)
    assert final_dist.shape == (B, V)

    print("KERNEL_OK")
</pallas_src>

<mosaic_0001>
module attributes {stable_mosaic.version = 11 : i64} {
  func.func @_embed_kernel(%arg0: i32, %arg1: memref<2xi32, #tpu.memory_space<smem>>, %arg2: memref<1x1x16xf32, #tpu.memory_space<vmem>>, %arg3: memref<1x1x16xf32, #tpu.memory_space<vmem>>) attributes {dimension_semantics = [#tpu.dimension_semantics<arbitrary>], iteration_bounds = array<i64: 2>, scalar_prefetch = 1 : i64, scratch_operands = 0 : i64, tpu.core_type = #tpu.core_type<tc>, window_params = [{transform_indices = @transform_0, window_bounds = array<i64: 1, 1, 16>}, {transform_indices = @transform_1, window_bounds = array<i64: 1, 1, 16>}]} {
    %c0 = arith.constant 0 : index
    %c0_0 = arith.constant 0 : index
    %c0_1 = arith.constant 0 : index
    %0 = vector.load %arg2[%c0, %c0_0, %c0_1] : memref<1x1x16xf32, #tpu.memory_space<vmem>>, vector<1x1x16xf32>
    %c0_2 = arith.constant 0 : index
    %c0_3 = arith.constant 0 : index
    %c0_4 = arith.constant 0 : index
    %1 = vector.load %arg3[%c0_2, %c0_3, %c0_4] : memref<1x1x16xf32, #tpu.memory_space<vmem>>, vector<1x1x16xf32>
    tpu.vector_store %arg3[%c0_2, %c0_3, %c0_4], %0 {strides = array<i32>} : memref<1x1x16xf32, #tpu.memory_space<vmem>>, vector<1x1x16xf32>,
    return
  }
  func.func @transform_0(%arg0: i32, %arg1: memref<2xi32, #tpu.memory_space<smem>>) -> (i32, i32, i32) {
    %0 = arith.index_cast %arg0 : i32 to index
    %1 = memref.load %arg1[%0] : memref<2xi32, #tpu.memory_space<smem>>
    %c0_i32 = arith.constant 0 : i32
    %c0_i32_0 = arith.constant 0 : i32
    %c0_i32_1 = arith.constant 0 : i32
    return %1, %c0_i32, %c0_i32_0 : i32, i32, i32
  }
  func.func @transform_1(%arg0: i32, %arg1: memref<2xi32, #tpu.memory_space<smem>>) -> (i32, i32, i32) {
    %c0_i32 = arith.constant 0 : i32
    %c0_i32_0 = arith.constant 0 : i32
    %c0_i32_1 = arith.constant 0 : i32
    return %arg0, %c0_i32, %c0_i32_0 : i32, i32, i32
  }
}

module attributes {stable_mosaic.version = 11 : i64} {
  func.func @_linear_kernel(%arg0: i32, %arg1: memref<2x80xf32, #tpu.memory_space<vmem>>, %arg2: memref<80x16xf32, #tpu.memory_space<vmem>>, %arg3: memref<1x16xf32, #tpu.memory_space<vmem>>, %arg4: memref<2x16xf32, #tpu.memory_space<vmem>>) attributes {dimension_semantics = [#tpu.dimension_semantics<parallel>], iteration_bounds = array<i64: 1>, scalar_prefetch = 0 : i64, scratch_operands = 0 : i64, tpu.core_type = #tpu.core_type<tc>, window_params = [{pipeline_mode = #tpu.pipeline_mode<synchronous>, transform_indices = @transform_0, window_bounds = array<i64: 2, 80>}, {transform_indices = @transform_1, window_bounds = array<i64: 80, 16>}, {transform_indices = @transform_2, window_bounds = array<i64: 1, 16>}, {transform_indices = @transform_3, window_bounds = array<i64: 2, 16>}]} {
    %c0 = arith.constant 0 : index
    %c0_0 = arith.constant 0 : index
    %0 = vector.load %arg1[%c0, %c0_0] : memref<2x80xf32, #tpu.memory_space<vmem>>, vector<2x80xf32>
    %c0_1 = arith.constant 0 : index
    %c0_2 = arith.constant 0 : index
    %1 = vector.load %arg2[%c0_1, %c0_2] : memref<80x16xf32, #tpu.memory_space<vmem>>, vector<80x16xf32>
    %cst = arith.constant dense<0.000000e+00> : vector<2x16xf32>
    %2 = tpu.matmul %0, %1, %cst {dimension_numbers = #tpu.dot_dimension_numbers<[1], [0], [0], [1], [0, 0, 1, 1], [], []>} : vector<2x80xf32>, vector<80x16xf32>, vector<2x16xf32> -> vector<2x16xf32>
    %c0_3 = arith.constant 0 : index
    %c0_4 = arith.constant 0 : index
    %3 = vector.load %arg3[%c0_3, %c0_4] : memref<1x16xf32, #tpu.memory_space<vmem>>, vector<1x16xf32>
    %4 = vector.broadcast %3 : vector<1x16xf32> to vector<2x16xf32>
    %5 = arith.addf %2, %4 : vector<2x16xf32>
    %c0_5 = arith.constant 0 : index
    %c0_6 = arith.constant 0 : index
    %6 = vector.load %arg4[%c0_5, %c0_6] : memref<2x16xf32, #tpu.memory_space<vmem>>, vector<2x16xf32>
    tpu.vector_store %arg4[%c0_5, %c0_6], %5 {strides = array<i32>} : memref<2x16xf32, #tpu.memory_space<vmem>>, vector<2x16xf32>,
    return
  }
  func.func @transform_0(%arg0: i32) -> (i32, i32) {
    %c0_i32 = arith.constant 0 : i32
    %c0_i32_0 = arith.constant 0 : i32
    %c0_i32_1 = arith.constant 0 : i32
    return %c0_i32, %c0_i32_0 : i32, i32
  }
  func.func @transform_1(%arg0: i32) -> (i32, i32) {
    %c0_i32 = arith.constant 0 : i32
    %c0_i32_0 = arith.constant 0 : i32
    return %c0_i32, %arg0 : i32, i32
  }
  func.func @transform_2(%arg0: i32) -> (i32, i32) {
    %c0_i32 = arith.constant 0 : i32
    %c0_i32_0 = arith.constant 0 : i32
    return %c0_i32, %arg0 : i32, i32
  }
  func.func @transform_3(%arg0: i32) -> (i32, i32) {
    %c0_i32 = arith.constant 0 : i32
    %c0_i32_0 = arith.constant 0 : i32
    return %c0_i32, %arg0 : i32, i32
  }
}

module attributes {stable_mosaic.version = 11 : i64} {
  func.func @_lstm_cell_kernel(%arg0: i32, %arg1: memref<2x16xf32, #tpu.memory_space<vmem>>, %arg2: memref<2x32xf32, #tpu.memory_space<vmem>>, %arg3: memref<2x32xf32, #tpu.memory_space<vmem>>, %arg4: memref<16x128xf32, #tpu.memory_space<vmem>>, %arg5: memref<32x128xf32, #tpu.memory_space<vmem>>, %arg6: memref<1x128xf32, #tpu.memory_space<vmem>>, %arg7: memref<2x32xf32, #tpu.memory_space<vmem>>, %arg8: memref<2x32xf32, #tpu.memory_space<vmem>>) attributes {dimension_semantics = [#tpu.dimension_semantics<arbitrary>], iteration_bounds = array<i64: 1>, scalar_prefetch = 0 : i64, scratch_operands = 0 : i64, tpu.core_type = #tpu.core_type<tc>, window_params = [{pipeline_mode = #tpu.pipeline_mode<synchronous>, transform_indices = @transform_0, window_bounds = array<i64: 2, 16>}, {pipeline_mode = #tpu.pipeline_mode<synchronous>, transform_indices = @transform_1, window_bounds = array<i64: 2, 32>}, {pipeline_mode = #tpu.pipeline_mode<synchronous>, transform_indices = @transform_2, window_bounds = array<i64: 2, 32>}, {pipeline_mode = #tpu.pipeline_mode<synchronous>, transform_indices = @transform_3, window_bounds = array<i64: 16, 128>}, {pipeline_mode = #tpu.pipeline_mode<synchronous>, transform_indices = @transform_4, window_bounds = array<i64: 32, 128>}, {pipeline_mode = #tpu.pipeline_mode<synchronous>, transform_indices = @transform_5, window_bounds = array<i64: 1, 128>}, {pipeline_mode = #tpu.pipeline_mode<synchronous>, transform_indices = @transform_6, window_bounds = array<i64: 2, 32>}, {pipeline_mode = #tpu.pipeline_mode<synchronous>, transform_indices = @transform_7, window_bounds = array<i64: 2, 32>}]} {
    %c0 = arith.constant 0 : index
    %c0_0 = arith.constant 0 : index
    %0 = vector.load %arg1[%c0, %c0_0] : memref<2x16xf32, #tpu.memory_space<vmem>>, vector<2x16xf32>
    %c0_1 = arith.constant 0 : index
    %c0_2 = arith.constant 0 : index
    %1 = vector.load %arg4[%c0_1, %c0_2] : memref<16x128xf32, #tpu.memory_space<vmem>>, vector<16x128xf32>
    %cst = arith.constant dense<0.000000e+00> : vector<2x128xf32>
    %2 = tpu.matmul %0, %1, %cst {dimension_numbers = #tpu.dot_dimension_numbers<[1], [0], [0], [1], [0, 0, 1, 1], [], []>} : vector<2x16xf32>, vector<16x128xf32>, vector<2x128xf32> -> vector<2x128xf32>
    %c0_3 = arith.constant 0 : index
    %c0_4 = arith.constant 0 : index
    %3 = vector.load %arg2[%c0_3, %c0_4] : memref<2x32xf32, #tpu.memory_space<vmem>>, vector<2x32xf32>
    %c0_5 = arith.constant 0 : index
    %c0_6 = arith.constant 0 : index
    %4 = vector.load %arg5[%c0_5, %c0_6] : memref<32x128xf32, #tpu.memory_space<vmem>>, vector<32x128xf32>
    %cst_7 = arith.constant dense<0.000000e+00> : vector<2x128xf32>
    %5 = tpu.matmul %3, %4, %cst_7 {dimension_numbers = #tpu.dot_dimension_numbers<[1], [0], [0], [1], [0, 0, 1, 1], [], []>} : vector<2x32xf32>, vector<32x128xf32>, vector<2x128xf32> -> vector<2x128xf32>
    %6 = arith.addf %2, %5 : vector<2x128xf32>
    %c0_8 = arith.constant 0 : index
    %c0_9 = arith.constant 0 : index
    %7 = vector.load %arg6[%c0_8, %c0_9] : memref<1x128xf32, #tpu.memory_space<vmem>>, vector<1x128xf32>
    %8 = vector.broadcast %7 : vector<1x128xf32> to vector<2x128xf32>
    %9 = arith.addf %6, %8 : vector<2x128xf32>
    %10 = vector.extract_strided_slice %9 {offsets = [0, 0], sizes = [2, 32], strides = [1, 1]} : vector<2x128xf32> to vector<2x32xf32>
    %cst_10 = arith.constant 0.000000e+00 : f32
    %11 = vector.broadcast %cst_10 : f32 to vector<2x32xf32>
    %12 = arith.subf %11, %10 : vector<2x32xf32>
    %13 = math.exp %12 : vector<2x32xf32>
    %cst_11 = arith.constant 1.000000e+00 : f32
    %14 = vector.broadcast %cst_11 : f32 to vector<2x32xf32>
    %15 = arith.addf %14, %13 : vector<2x32xf32>
    %cst_12 = arith.constant 1.000000e+00 : f32
    %16 = vector.broadcast %cst_12 : f32 to vector<2x32xf32>
    %17 = arith.divf %16, %15 : vector<2x32xf32>
    %18 = vector.extract_strided_slice %9 {offsets = [0, 32], sizes = [2, 32], strides = [1, 1]} : vector<2x128xf32> to vector<2x32xf32>
    %cst_13 = arith.constant 0.000000e+00 : f32
    %19 = vector.broadcast %cst_13 : f32 to vector<2x32xf32>
    %20 = arith.subf %19, %18 : vector<2x32xf32>
    %21 = math.exp %20 : vector<2x32xf32>
    %cst_14 = arith.constant 1.000000e+00 : f32
    %22 = vector.broadcast %cst_14 : f32 to vector<2x32xf32>
    %23 = arith.addf %22, %21 : vector<2x32xf32>
    %cst_15 = arith.constant 1.000000e+00 : f32
    %24 = vector.broadcast %cst_15 : f32 to vector<2x32xf32>
    %25 = arith.divf %24, %23 : vector<2x32xf32>
    %26 = vector.extract_strided_slice %9 {offsets = [0, 64], sizes = [2, 32], strides = [1, 1]} : vector<2x128xf32> to vector<2x32xf32>
    %27 = math.tanh %26 : vector<2x32xf32>
    %28 = vector.extract_strided_slice %9 {offsets = [0, 96], sizes = [2, 32], strides = [1, 1]} : vector<2x128xf32> to vector<2x32xf32>
    %cst_16 = arith.constant 0.000000e+00 : f32
    %29 = vector.broadcast %cst_16 : f32 to vector<2x32xf32>
    %30 = arith.subf %29, %28 : vector<2x32xf32>
    %31 = math.exp %30 : vector<2x32xf32>
    %cst_17 = arith.constant 1.000000e+00 : f32
    %32 = vector.broadcast %cst_17 : f32 to vector<2x32xf32>
    %33 = arith.addf %32, %31 : vector<2x32xf32>
    %cst_18 = arith.constant 1.000000e+00 : f32
    %34 = vector.broadcast %cst_18 : f32 to vector<2x32xf32>
    %35 = arith.divf %34, %33 : vector<2x32xf32>
    %c0_19 = arith.constant 0 : index
    %c0_20 = arith.constant 0 : index
    %36 = vector.load %arg3[%c0_19, %c0_20] : memref<2x32xf32, #tpu.memory_space<vmem>>, vector<2x32xf32>
    %37 = arith.mulf %25, %36 : vector<2x32xf32>
    %38 = arith.mulf %17, %27 : vector<2x32xf32>
    %39 = arith.addf %37, %38 : vector<2x32xf32>
    %40 = math.tanh %39 : vector<2x32xf32>
    %41 = arith.mulf %35, %40 : vector<2x32xf32>
    %c0_21 = arith.constant 0 : index
    %c0_22 = arith.constant 0 : index
    %42 = vector.load %arg8[%c0_21, %c0_22] : memref<2x32xf32, #tpu.memory_space<vmem>>, vector<2x32xf32>
    tpu.vector_store %arg8[%c0_21, %c0_22], %39 {strides = array<i32>} : memref<2x32xf32, #tpu.memory_space<vmem>>, vector<2x32xf32>,
    %c0_23 = arith.constant 0 : index
    %c0_24 = arith.constant 0 : index
    %43 = vector.load %arg7[%c0_23, %c0_24] : memref<2x32xf32, #tpu.memory_space<vmem>>, vector<2x32xf32>
    tpu.vector_store %arg7[%c0_23, %c0_24], %41 {strides = array<i32>} : memref<2x32xf32, #tpu.memory_space<vmem>>, vector<2x32xf32>,
    return
  }
  func.func @transform_0(%arg0: i32) -> (i32, i32) {
    %c0_i32 = arith.constant 0 : i32
    %c0_i32_0 = arith.constant 0 : i32
    %c0_i32_1 = arith.constant 0 : i32
    return %c0_i32, %c0_i32_0 : i32, i32
  }
  func.func @transform_1(%arg0: i32) -> (i32, i32) {
    %c0_i32 = arith.constant 0 : i32
    %c0_i32_0 = arith.constant 0 : i32
    %c0_i32_1 = arith.constant 0 : i32
    return %c0_i32, %c0_i32_0 : i32, i32
  }
  func.func @transform_2(%arg0: i32) -> (i32, i32) {
    %c0_i32 = arith.constant 0 : i32
    %c0_i32_0 = arith.constant 0 : i32
    %c0_i32_1 = arith.constant 0 : i32
    return %c0_i32, %c0_i32_0 : i32, i32
  }
  func.func @transform_3(%arg0: i32) -> (i32, i32) {
    %c0_i32 = arith.constant 0 : i32
    %c0_i32_0 = arith.constant 0 : i32
    %c0_i32_1 = arith.constant 0 : i32
    return %c0_i32, %c0_i32_0 : i32, i32
  }
  func.func @transform_4(%arg0: i32) -> (i32, i32) {
    %c0_i32 = arith.constant 0 : i32
    %c0_i32_0 = arith.constant 0 : i32
    %c0_i32_1 = arith.constant 0 : i32
    return %c0_i32, %c0_i32_0 : i32, i32
  }
  func.func @transform_5(%arg0: i32) -> (i32, i32) {
    %c0_i32 = arith.constant 0 : i32
    %c0_i32_0 = arith.constant 0 : i32
    %c0_i32_1 = arith.constant 0 : i32
    return %c0_i32, %c0_i32_0 : i32, i32
  }
  func.func @transform_6(%arg0: i32) -> (i32, i32) {
    %c0_i32 = arith.constant 0 : i32
    %c0_i32_0 = arith.constant 0 : i32
    %c0_i32_1 = arith.constant 0 : i32
    return %c0_i32, %c0_i32_0 : i32, i32
  }
  func.func @transform_7(%arg0: i32) -> (i32, i32) {
    %c0_i32 = arith.constant 0 : i32
    %c0_i32_0 = arith.constant 0 : i32
    %c0_i32_1 = arith.constant 0 : i32
    return %c0_i32, %c0_i32_0 : i32, i32
  }
}

module attributes {stable_mosaic.version = 11 : i64} {
  func.func @_attention_kernel(%arg0: i32, %arg1: memref<1x1x64xf32, #tpu.memory_space<vmem>>, %arg2: memref<1x8x64xf32, #tpu.memory_space<vmem>>, %arg3: memref<1x8x64xf32, #tpu.memory_space<vmem>>, %arg4: memref<1x64xf32, #tpu.memory_space<vmem>>, %arg5: memref<1x64xf32, #tpu.memory_space<vmem>>, %arg6: memref<1x8x1xf32, #tpu.memory_space<vmem>>, %arg7: memref<1x8x1xf32, #tpu.memory_space<vmem>>, %arg8: memref<1x1x64xf32, #tpu.memory_space<vmem>>, %arg9: memref<1x8x1xf32, #tpu.memory_space<vmem>>, %arg10: memref<1x8x1xf32, #tpu.memory_space<vmem>>) attributes {dimension_semantics = [#tpu.dimension_semantics<parallel>], iteration_bounds = array<i64: 2>, scalar_prefetch = 0 : i64, scratch_operands = 0 : i64, tpu.core_type = #tpu.core_type<tc>, window_params = [{transform_indices = @transform_0, window_bounds = array<i64: 1, 1, 64>}, {transform_indices = @transform_1, window_bounds = array<i64: 1, 8, 64>}, {transform_indices = @transform_2, window_bounds = array<i64: 1, 8, 64>}, {pipeline_mode = #tpu.pipeline_mode<synchronous>, transform_indices = @transform_3, window_bounds = array<i64: 1, 64>}, {pipeline_mode = #tpu.pipeline_mode<synchronous>, transform_indices = @transform_4, window_bounds = array<i64: 1, 64>}, {transform_indices = @transform_5, window_bounds = array<i64: 1, 8, 1>}, {transform_indices = @transform_6, window_bounds = array<i64: 1, 8, 1>}, {transform_indices = @transform_7, window_bounds = array<i64: 1, 1, 64>}, {transform_indices = @transform_8, window_bounds = array<i64: 1, 8, 1>}, {transform_indices = @transform_9, window_bounds = array<i64: 1, 8, 1>}]} {
    %c0 = arith.constant 0 : index
    %c0_0 = arith.constant 0 : index
    %c0_1 = arith.constant 0 : index
    %0 = vector.load %arg2[%c0, %c0_0, %c0_1] : memref<1x8x64xf32, #tpu.memory_space<vmem>>, vector<1x8x64xf32>
    %1 = vector.shape_cast %0 : vector<1x8x64xf32> to vector<8x64xf32>
    %c0_2 = arith.constant 0 : index
    %c0_3 = arith.constant 0 : index
    %c0_4 = arith.constant 0 : index
    %2 = vector.load %arg3[%c0_2, %c0_3, %c0_4] : memref<1x8x64xf32, #tpu.memory_space<vmem>>, vector<1x8x64xf32>
    %3 = vector.shape_cast %2 : vector<1x8x64xf32> to vector<8x64xf32>
    %c0_5 = arith.constant 0 : index
    %c0_6 = arith.constant 0 : index
    %c0_7 = arith.constant 0 : index
    %4 = vector.load %arg1[%c0_5, %c0_6, %c0_7] : memref<1x1x64xf32, #tpu.memory_space<vmem>>, vector<1x1x64xf32>
    %5 = vector.shape_cast %4 : vector<1x1x64xf32> to vector<1x64xf32>
    %c0_8 = arith.constant 0 : index
    %c0_9 = arith.constant 0 : index
    %6 = vector.load %arg4[%c0_8, %c0_9] : memref<1x64xf32, #tpu.memory_space<vmem>>, vector<1x64xf32>
    %c0_10 = arith.constant 0 : index
    %c0_11 = arith.constant 0 : index
    %7 = vector.load %arg5[%c0_10, %c0_11] : memref<1x64xf32, #tpu.memory_space<vmem>>, vector<1x64xf32>
    %c0_12 = arith.constant 0 : index
    %c0_13 = arith.constant 0 : index
    %c0_14 = arith.constant 0 : index
    %8 = vector.load %arg6[%c0_12, %c0_13, %c0_14] : memref<1x8x1xf32, #tpu.memory_space<vmem>>, vector<1x8x1xf32>
    %9 = vector.shape_cast %8 : vector<1x8x1xf32> to vector<8x1xf32>
    %c0_15 = arith.constant 0 : index
    %c0_16 = arith.constant 0 : index
    %c0_17 = arith.constant 0 : index
    %10 = vector.load %arg7[%c0_15, %c0_16, %c0_17] : memref<1x8x1xf32, #tpu.memory_space<vmem>>, vector<1x8x1xf32>
    %11 = vector.shape_cast %10 : vector<1x8x1xf32> to vector<8x1xf32>
    %12 = vector.broadcast %5 : vector<1x64xf32> to vector<8x64xf32>
    %13 = arith.addf %1, %12 : vector<8x64xf32>
    %14 = vector.broadcast %11 : vector<8x1xf32> to vector<8x64xf32>
    %15 = vector.broadcast %6 : vector<1x64xf32> to vector<8x64xf32>
    %16 = arith.mulf %14, %15 : vector<8x64xf32>
    %17 = arith.addf %13, %16 : vector<8x64xf32>
    %18 = math.tanh %17 : vector<8x64xf32>
    %19 = vector.broadcast %7 : vector<1x64xf32> to vector<8x64xf32>
    %20 = arith.mulf %18, %19 : vector<8x64xf32>
    %cst = arith.constant dense<0.000000e+00> : vector<8xf32>
    %21 = vector.multi_reduction <add>, %20, %cst [1] : vector<8x64xf32> to vector<8xf32>
    %22 = vector.shape_cast %21 : vector<8xf32> to vector<8x1xf32>
    %cst_18 = arith.constant dense<0xFF800000> : vector<1xf32>
    %23 = vector.multi_reduction <maximumf>, %22, %cst_18 [0] : vector<8x1xf32> to vector<1xf32>
    %24 = vector.shape_cast %23 : vector<1xf32> to vector<1x1xf32>
    %25 = vector.broadcast %24 : vector<1x1xf32> to vector<8x1xf32>
    %26 = arith.subf %22, %25 : vector<8x1xf32>
    %27 = math.exp %26 : vector<8x1xf32>
    %cst_19 = arith.constant dense<0.000000e+00> : vector<1xf32>
    %28 = vector.multi_reduction <add>, %27, %cst_19 [0] : vector<8x1xf32> to vector<1xf32>
    %29 = vector.shape_cast %28 : vector<1xf32> to vector<1x1xf32>
    %30 = vector.broadcast %29 : vector<1x1xf32> to vector<8x1xf32>
    %31 = arith.divf %27, %30 : vector<8x1xf32>
    %32 = arith.mulf %31, %9 : vector<8x1xf32>
    %cst_20 = arith.constant dense<0.000000e+00> : vector<1xf32>
    %33 = vector.multi_reduction <add>, %32, %cst_20 [0] : vector<8x1xf32> to vector<1xf32>
    %34 = vector.shape_cast %33 : vector<1xf32> to vector<1x1xf32>
    %cst_21 = arith.constant 9.99999996E-13 : f32
    %35 = vector.broadcast %cst_21 : f32 to vector<1x1xf32>
    %36 = arith.addf %34, %35 : vector<1x1xf32>
    %37 = vector.broadcast %36 : vector<1x1xf32> to vector<8x1xf32>
    %38 = arith.divf %32, %37 : vector<8x1xf32>
    %39 = vector.broadcast %38 : vector<8x1xf32> to vector<8x64xf32>
    %40 = arith.mulf %39, %3 : vector<8x64xf32>
    %cst_22 = arith.constant dense<0.000000e+00> : vector<64xf32>
    %41 = vector.multi_reduction <add>, %40, %cst_22 [0] : vector<8x64xf32> to vector<64xf32>
    %42 = vector.shape_cast %41 : vector<64xf32> to vector<1x64xf32>
    %43 = vector.shape_cast %42 : vector<1x64xf32> to vector<1x1x64xf32>
    %c0_23 = arith.constant 0 : index
    %c0_24 = arith.constant 0 : index
    %c0_25 = arith.constant 0 : index
    %44 = vector.load %arg8[%c0_23, %c0_24, %c0_25] : memref<1x1x64xf32, #tpu.memory_space<vmem>>, vector<1x1x64xf32>
    tpu.vector_store %arg8[%c0_23, %c0_24, %c0_25], %43 {strides = array<i32>} : memref<1x1x64xf32, #tpu.memory_space<vmem>>, vector<1x1x64xf32>,
    %45 = vector.shape_cast %38 : vector<8x1xf32> to vector<1x8x1xf32>
    %c0_26 = arith.constant 0 : index
    %c0_27 = arith.constant 0 : index
    %c0_28 = arith.constant 0 : index
    %46 = vector.load %arg9[%c0_26, %c0_27, %c0_28] : memref<1x8x1xf32, #tpu.memory_space<vmem>>, vector<1x8x1xf32>
    tpu.vector_store %arg9[%c0_26, %c0_27, %c0_28], %45 {strides = array<i32>} : memref<1x8x1xf32, #tpu.memory_space<vmem>>, vector<1x8x1xf32>,
    %47 = arith.addf %11, %38 : vector<8x1xf32>
    %48 = vector.shape_cast %47 : vector<8x1xf32> to vector<1x8x1xf32>
    %c0_29 = arith.constant 0 : index
    %c0_30 = arith.constant 0 : index
    %c0_31 = arith.constant 0 : index
    %49 = vector.load %arg10[%c0_29, %c0_30, %c0_31] : memref<1x8x1xf32, #tpu.memory_space<vmem>>, vector<1x8x1xf32>
    tpu.vector_store %arg10[%c0_29, %c0_30, %c0_31], %48 {strides = array<i32>} : memref<1x8x1xf32, #tpu.memory_space<vmem>>, vector<1x8x1xf32>,
    return
  }
  func.func @transform_0(%arg0: i32) -> (i32, i32, i32) {
    %c0_i32 = arith.constant 0 : i32
    %c0_i32_0 = arith.constant 0 : i32
    %c0_i32_1 = arith.constant 0 : i32
    return %arg0, %c0_i32, %c0_i32_0 : i32, i32, i32
  }
  func.func @transform_1(%arg0: i32) -> (i32, i32, i32) {
    %c0_i32 = arith.constant 0 : i32
    %c0_i32_0 = arith.constant 0 : i32
    %c0_i32_1 = arith.constant 0 : i32
    return %arg0, %c0_i32, %c0_i32_0 : i32, i32, i32
  }
  func.func @transform_2(%arg0: i32) -> (i32, i32, i32) {
    %c0_i32 = arith.constant 0 : i32
    %c0_i32_0 = arith.constant 0 : i32
    %c0_i32_1 = arith.constant 0 : i32
    return %arg0, %c0_i32, %c0_i32_0 : i32, i32, i32
  }
  func.func @transform_3(%arg0: i32) -> (i32, i32) {
    %c0_i32 = arith.constant 0 : i32
    %c0_i32_0 = arith.constant 0 : i32
    %c0_i32_1 = arith.constant 0 : i32
    return %c0_i32, %c0_i32_0 : i32, i32
  }
  func.func @transform_4(%arg0: i32) -> (i32, i32) {
    %c0_i32 = arith.constant 0 : i32
    %c0_i32_0 = arith.constant 0 : i32
    %c0_i32_1 = arith.constant 0 : i32
    return %c0_i32, %c0_i32_0 : i32, i32
  }
  func.func @transform_5(%arg0: i32) -> (i32, i32, i32) {
    %c0_i32 = arith.constant 0 : i32
    %c0_i32_0 = arith.constant 0 : i32
    %c0_i32_1 = arith.constant 0 : i32
    return %arg0, %c0_i32, %c0_i32_0 : i32, i32, i32
  }
  func.func @transform_6(%arg0: i32) -> (i32, i32, i32) {
    %c0_i32 = arith.constant 0 : i32
    %c0_i32_0 = arith.constant 0 : i32
    %c0_i32_1 = arith.constant 0 : i32
    return %arg0, %c0_i32, %c0_i32_0 : i32, i32, i32
  }
  func.func @transform_7(%arg0: i32) -> (i32, i32, i32) {
    %c0_i32 = arith.constant 0 : i32
    %c0_i32_0 = arith.constant 0 : i32
    %c0_i32_1 = arith.constant 0 : i32
    return %arg0, %c0_i32, %c0_i32_0 : i32, i32, i32
  }
  func.func @transform_8(%arg0: i32) -> (i32, i32, i32) {
    %c0_i32 = arith.constant 0 : i32
    %c0_i32_0 = arith.constant 0 : i32
    %c0_i32_1 = arith.constant 0 : i32
    return %arg0, %c0_i32, %c0_i32_0 : i32, i32, i32
  }
  func.func @transform_9(%arg0: i32) -> (i32, i32, i32) {
    %c0_i32 = arith.constant 0 : i32
    %c0_i32_0 = arith.constant 0 : i32
    %c0_i32_1 = arith.constant 0 : i32
    return %arg0, %c0_i32, %c0_i32_0 : i32, i32, i32
  }
}

module attributes {stable_mosaic.version = 11 : i64} {
  func.func @_linear_kernel(%arg0: i32, %arg1: memref<2x64xf32, #tpu.memory_space<vmem>>, %arg2: memref<64x64xf32, #tpu.memory_space<vmem>>, %arg3: memref<1x64xf32, #tpu.memory_space<vmem>>, %arg4: memref<2x64xf32, #tpu.memory_space<vmem>>) attributes {dimension_semantics = [#tpu.dimension_semantics<parallel>], iteration_bounds = array<i64: 1>, scalar_prefetch = 0 : i64, scratch_operands = 0 : i64, tpu.core_type = #tpu.core_type<tc>, window_params = [{pipeline_mode = #tpu.pipeline_mode<synchronous>, transform_indices = @transform_0, window_bounds = array<i64: 2, 64>}, {transform_indices = @transform_1, window_bounds = array<i64: 64, 64>}, {transform_indices = @transform_2, window_bounds = array<i64: 1, 64>}, {transform_indices = @transform_3, window_bounds = array<i64: 2, 64>}]} {
    %c0 = arith.constant 0 : index
    %c0_0 = arith.constant 0 : index
    %0 = vector.load %arg1[%c0, %c0_0] : memref<2x64xf32, #tpu.memory_space<vmem>>, vector<2x64xf32>
    %c0_1 = arith.constant 0 : index
    %c0_2 = arith.constant 0 : index
    %1 = vector.load %arg2[%c0_1, %c0_2] : memref<64x64xf32, #tpu.memory_space<vmem>>, vector<64x64xf32>
    %cst = arith.constant dense<0.000000e+00> : vector<2x64xf32>
    %2 = tpu.matmul %0, %1, %cst {dimension_numbers = #tpu.dot_dimension_numbers<[1], [0], [0], [1], [0, 0, 1, 1], [], []>} : vector<2x64xf32>, vector<64x64xf32>, vector<2x64xf32> -> vector<2x64xf32>
    %c0_3 = arith.constant 0 : index
    %c0_4 = arith.constant 0 : index
    %3 = vector.load %arg3[%c0_3, %c0_4] : memref<1x64xf32, #tpu.memory_space<vmem>>, vector<1x64xf32>
    %4 = vector.broadcast %3 : vector<1x64xf32> to vector<2x64xf32>
    %5 = arith.addf %2, %4 : vector<2x64xf32>
    %c0_5 = arith.constant 0 : index
    %c0_6 = arith.constant 0 : index
    %6 = vector.load %arg4[%c0_5, %c0_6] : memref<2x64xf32, #tpu.memory_space<vmem>>, vector<2x64xf32>
    tpu.vector_store %arg4[%c0_5, %c0_6], %5 {strides = array<i32>} : memref<2x64xf32, #tpu.memory_space<vmem>>, vector<2x64xf32>,
    return
  }
  func.func @transform_0(%arg0: i32) -> (i32, i32) {
    %c0_i32 = arith.constant 0 : i32
    %c0_i32_0 = arith.constant 0 : i32
    %c0_i32_1 = arith.constant 0 : i32
    return %c0_i32, %c0_i32_0 : i32, i32
  }
  func.func @transform_1(%arg0: i32) -> (i32, i32) {
    %c0_i32 = arith.constant 0 : i32
    %c0_i32_0 = arith.constant 0 : i32
    return %c0_i32, %arg0 : i32, i32
  }
  func.func @transform_2(%arg0: i32) -> (i32, i32) {
    %c0_i32 = arith.constant 0 : i32
    %c0_i32_0 = arith.constant 0 : i32
    return %c0_i32, %arg0 : i32, i32
  }
  func.func @transform_3(%arg0: i32) -> (i32, i32) {
    %c0_i32 = arith.constant 0 : i32
    %c0_i32_0 = arith.constant 0 : i32
    return %c0_i32, %arg0 : i32, i32
  }
}

module attributes {stable_mosaic.version = 11 : i64} {
  func.func @_linear_kernel(%arg0: i32, %arg1: memref<2x96xf32, #tpu.memory_space<vmem>>, %arg2: memref<96x32xf32, #tpu.memory_space<vmem>>, %arg3: memref<1x32xf32, #tpu.memory_space<vmem>>, %arg4: memref<2x32xf32, #tpu.memory_space<vmem>>) attributes {dimension_semantics = [#tpu.dimension_semantics<parallel>], iteration_bounds = array<i64: 1>, scalar_prefetch = 0 : i64, scratch_operands = 0 : i64, tpu.core_type = #tpu.core_type<tc>, window_params = [{pipeline_mode = #tpu.pipeline_mode<synchronous>, transform_indices = @transform_0, window_bounds = array<i64: 2, 96>}, {transform_indices = @transform_1, window_bounds = array<i64: 96, 32>}, {transform_indices = @transform_2, window_bounds = array<i64: 1, 32>}, {transform_indices = @transform_3, window_bounds = array<i64: 2, 32>}]} {
    %c0 = arith.constant 0 : index
    %c0_0 = arith.constant 0 : index
    %0 = vector.load %arg1[%c0, %c0_0] : memref<2x96xf32, #tpu.memory_space<vmem>>, vector<2x96xf32>
    %c0_1 = arith.constant 0 : index
    %c0_2 = arith.constant 0 : index
    %1 = vector.load %arg2[%c0_1, %c0_2] : memref<96x32xf32, #tpu.memory_space<vmem>>, vector<96x32xf32>
    %cst = arith.constant dense<0.000000e+00> : vector<2x32xf32>
    %2 = tpu.matmul %0, %1, %cst {dimension_numbers = #tpu.dot_dimension_numbers<[1], [0], [0], [1], [0, 0, 1, 1], [], []>} : vector<2x96xf32>, vector<96x32xf32>, vector<2x32xf32> -> vector<2x32xf32>
    %c0_3 = arith.constant 0 : index
    %c0_4 = arith.constant 0 : index
    %3 = vector.load %arg3[%c0_3, %c0_4] : memref<1x32xf32, #tpu.memory_space<vmem>>, vector<1x32xf32>
    %4 = vector.broadcast %3 : vector<1x32xf32> to vector<2x32xf32>
    %5 = arith.addf %2, %4 : vector<2x32xf32>
    %c0_5 = arith.constant 0 : index
    %c0_6 = arith.constant 0 : index
    %6 = vector.load %arg4[%c0_5, %c0_6] : memref<2x32xf32, #tpu.memory_space<vmem>>, vector<2x32xf32>
    tpu.vector_store %arg4[%c0_5, %c0_6], %5 {strides = array<i32>} : memref<2x32xf32, #tpu.memory_space<vmem>>, vector<2x32xf32>,
    return
  }
  func.func @transform_0(%arg0: i32) -> (i32, i32) {
    %c0_i32 = arith.constant 0 : i32
    %c0_i32_0 = arith.constant 0 : i32
    %c0_i32_1 = arith.constant 0 : i32
    return %c0_i32, %c0_i32_0 : i32, i32
  }
  func.func @transform_1(%arg0: i32) -> (i32, i32) {
    %c0_i32 = arith.constant 0 : i32
    %c0_i32_0 = arith.constant 0 : i32
    return %c0_i32, %arg0 : i32, i32
  }
  func.func @transform_2(%arg0: i32) -> (i32, i32) {
    %c0_i32 = arith.constant 0 : i32
    %c0_i32_0 = arith.constant 0 : i32
    return %c0_i32, %arg0 : i32, i32
  }
  func.func @transform_3(%arg0: i32) -> (i32, i32) {
    %c0_i32 = arith.constant 0 : i32
    %c0_i32_0 = arith.constant 0 : i32
    return %c0_i32, %arg0 : i32, i32
  }
}

module attributes {stable_mosaic.version = 11 : i64} {
  func.func @_linear_kernel(%arg0: i32, %arg1: memref<2x32xf32, #tpu.memory_space<vmem>>, %arg2: memref<32x50xf32, #tpu.memory_space<vmem>>, %arg3: memref<1x50xf32, #tpu.memory_space<vmem>>, %arg4: memref<2x50xf32, #tpu.memory_space<vmem>>) attributes {dimension_semantics = [#tpu.dimension_semantics<parallel>], iteration_bounds = array<i64: 1>, scalar_prefetch = 0 : i64, scratch_operands = 0 : i64, tpu.core_type = #tpu.core_type<tc>, window_params = [{pipeline_mode = #tpu.pipeline_mode<synchronous>, transform_indices = @transform_0, window_bounds = array<i64: 2, 32>}, {transform_indices = @transform_1, window_bounds = array<i64: 32, 50>}, {transform_indices = @transform_2, window_bounds = array<i64: 1, 50>}, {transform_indices = @transform_3, window_bounds = array<i64: 2, 50>}]} {
    %c0 = arith.constant 0 : index
    %c0_0 = arith.constant 0 : index
    %0 = vector.load %arg1[%c0, %c0_0] : memref<2x32xf32, #tpu.memory_space<vmem>>, vector<2x32xf32>
    %c0_1 = arith.constant 0 : index
    %c0_2 = arith.constant 0 : index
    %1 = vector.load %arg2[%c0_1, %c0_2] : memref<32x50xf32, #tpu.memory_space<vmem>>, vector<32x50xf32>
    %cst = arith.constant dense<0.000000e+00> : vector<2x50xf32>
    %2 = tpu.matmul %0, %1, %cst {dimension_numbers = #tpu.dot_dimension_numbers<[1], [0], [0], [1], [0, 0, 1, 1], [], []>} : vector<2x32xf32>, vector<32x50xf32>, vector<2x50xf32> -> vector<2x50xf32>
    %c0_3 = arith.constant 0 : index
    %c0_4 = arith.constant 0 : index
    %3 = vector.load %arg3[%c0_3, %c0_4] : memref<1x50xf32, #tpu.memory_space<vmem>>, vector<1x50xf32>
    %4 = vector.broadcast %3 : vector<1x50xf32> to vector<2x50xf32>
    %5 = arith.addf %2, %4 : vector<2x50xf32>
    %c0_5 = arith.constant 0 : index
    %c0_6 = arith.constant 0 : index
    %6 = vector.load %arg4[%c0_5, %c0_6] : memref<2x50xf32, #tpu.memory_space<vmem>>, vector<2x50xf32>
    tpu.vector_store %arg4[%c0_5, %c0_6], %5 {strides = array<i32>} : memref<2x50xf32, #tpu.memory_space<vmem>>, vector<2x50xf32>,
    return
  }
  func.func @transform_0(%arg0: i32) -> (i32, i32) {
    %c0_i32 = arith.constant 0 : i32
    %c0_i32_0 = arith.constant 0 : i32
    %c0_i32_1 = arith.constant 0 : i32
    return %c0_i32, %c0_i32_0 : i32, i32
  }
  func.func @transform_1(%arg0: i32) -> (i32, i32) {
    %c0_i32 = arith.constant 0 : i32
    %c0_i32_0 = arith.constant 0 : i32
    return %c0_i32, %arg0 : i32, i32
  }
  func.func @transform_2(%arg0: i32) -> (i32, i32) {
    %c0_i32 = arith.constant 0 : i32
    %c0_i32_0 = arith.constant 0 : i32
    return %c0_i32, %arg0 : i32, i32
  }
  func.func @transform_3(%arg0: i32) -> (i32, i32) {
    %c0_i32 = arith.constant 0 : i32
    %c0_i32_0 = arith.constant 0 : i32
    return %c0_i32, %arg0 : i32, i32
  }
}

module attributes {stable_mosaic.version = 11 : i64} {
  func.func @_linear_kernel(%arg0: i32, %arg1: memref<2x144xf32, #tpu.memory_space<vmem>>, %arg2: memref<144x1xf32, #tpu.memory_space<vmem>>, %arg3: memref<1x1xf32, #tpu.memory_space<vmem>>, %arg4: memref<2x1xf32, #tpu.memory_space<vmem>>) attributes {dimension_semantics = [#tpu.dimension_semantics<parallel>], iteration_bounds = array<i64: 1>, scalar_prefetch = 0 : i64, scratch_operands = 0 : i64, tpu.core_type = #tpu.core_type<tc>, window_params = [{pipeline_mode = #tpu.pipeline_mode<synchronous>, transform_indices = @transform_0, window_bounds = array<i64: 2, 144>}, {transform_indices = @transform_1, window_bounds = array<i64: 144, 1>}, {transform_indices = @transform_2, window_bounds = array<i64: 1, 1>}, {transform_indices = @transform_3, window_bounds = array<i64: 2, 1>}]} {
    %c0 = arith.constant 0 : index
    %c0_0 = arith.constant 0 : index
    %0 = vector.load %arg1[%c0, %c0_0] : memref<2x144xf32, #tpu.memory_space<vmem>>, vector<2x144xf32>
    %c0_1 = arith.constant 0 : index
    %c0_2 = arith.constant 0 : index
    %1 = vector.load %arg2[%c0_1, %c0_2] : memref<144x1xf32, #tpu.memory_space<vmem>>, vector<144x1xf32>
    %cst = arith.constant dense<0.000000e+00> : vector<2x1xf32>
    %2 = tpu.matmul %0, %1, %cst {dimension_numbers = #tpu.dot_dimension_numbers<[1], [0], [0], [1], [0, 0, 1, 1], [], []>} : vector<2x144xf32>, vector<144x1xf32>, vector<2x1xf32> -> vector<2x1xf32>
    %c0_3 = arith.constant 0 : index
    %c0_4 = arith.constant 0 : index
    %3 = vector.load %arg3[%c0_3, %c0_4] : memref<1x1xf32, #tpu.memory_space<vmem>>, vector<1x1xf32>
    %4 = vector.broadcast %3 : vector<1x1xf32> to vector<2x1xf32>
    %5 = arith.addf %2, %4 : vector<2x1xf32>
    %cst_5 = arith.constant 0.000000e+00 : f32
    %6 = vector.broadcast %cst_5 : f32 to vector<2x1xf32>
    %7 = arith.subf %6, %5 : vector<2x1xf32>
    %8 = math.exp %7 : vector<2x1xf32>
    %cst_6 = arith.constant 1.000000e+00 : f32
    %9 = vector.broadcast %cst_6 : f32 to vector<2x1xf32>
    %10 = arith.addf %9, %8 : vector<2x1xf32>
    %cst_7 = arith.constant 1.000000e+00 : f32
    %11 = vector.broadcast %cst_7 : f32 to vector<2x1xf32>
    %12 = arith.divf %11, %10 : vector<2x1xf32>
    %c0_8 = arith.constant 0 : index
    %c0_9 = arith.constant 0 : index
    %13 = vector.load %arg4[%c0_8, %c0_9] : memref<2x1xf32, #tpu.memory_space<vmem>>, vector<2x1xf32>
    tpu.vector_store %arg4[%c0_8, %c0_9], %12 {strides = array<i32>} : memref<2x1xf32, #tpu.memory_space<vmem>>, vector<2x1xf32>,
    return
  }
  func.func @transform_0(%arg0: i32) -> (i32, i32) {
    %c0_i32 = arith.constant 0 : i32
    %c0_i32_0 = arith.constant 0 : i32
    %c0_i32_1 = arith.constant 0 : i32
    return %c0_i32, %c0_i32_0 : i32, i32
  }
  func.func @transform_1(%arg0: i32) -> (i32, i32) {
    %c0_i32 = arith.constant 0 : i32
    %c0_i32_0 = arith.constant 0 : i32
    return %c0_i32, %arg0 : i32, i32
  }
  func.func @transform_2(%arg0: i32) -> (i32, i32) {
    %c0_i32 = arith.constant 0 : i32
    %c0_i32_0 = arith.constant 0 : i32
    return %c0_i32, %arg0 : i32, i32
  }
  func.func @transform_3(%arg0: i32) -> (i32, i32) {
    %c0_i32 = arith.constant 0 : i32
    %c0_i32_0 = arith.constant 0 : i32
    return %c0_i32, %arg0 : i32, i32
  }
}

module attributes {stable_mosaic.version = 11 : i64} {
  func.func @_final_dist_kernel(%arg0: i32, %arg1: memref<2x50xf32, #tpu.memory_space<vmem>>, %arg2: memref<2x1xf32, #tpu.memory_space<vmem>>, %arg3: memref<2x8xf32, #tpu.memory_space<vmem>>, %arg4: memref<2x8xi32, #tpu.memory_space<vmem>>, %arg5: memref<2x50xf32, #tpu.memory_space<vmem>>) attributes {dimension_semantics = [#tpu.dimension_semantics<arbitrary>], iteration_bounds = array<i64: 1>, scalar_prefetch = 0 : i64, scratch_operands = 0 : i64, tpu.core_type = #tpu.core_type<tc>, window_params = [{pipeline_mode = #tpu.pipeline_mode<synchronous>, transform_indices = @transform_0, window_bounds = array<i64: 2, 50>}, {pipeline_mode = #tpu.pipeline_mode<synchronous>, transform_indices = @transform_1, window_bounds = array<i64: 2, 1>}, {pipeline_mode = #tpu.pipeline_mode<synchronous>, transform_indices = @transform_2, window_bounds = array<i64: 2, 8>}, {pipeline_mode = #tpu.pipeline_mode<synchronous>, transform_indices = @transform_3, window_bounds = array<i64: 2, 8>}, {pipeline_mode = #tpu.pipeline_mode<synchronous>, transform_indices = @transform_4, window_bounds = array<i64: 2, 50>}]} {
    %c0 = arith.constant 0 : index
    %c0_0 = arith.constant 0 : index
    %0 = vector.load %arg1[%c0, %c0_0] : memref<2x50xf32, #tpu.memory_space<vmem>>, vector<2x50xf32>
    %cst = arith.constant dense<0xFF800000> : vector<2xf32>
    %1 = vector.multi_reduction <maximumf>, %0, %cst [1] : vector<2x50xf32> to vector<2xf32>
    %2 = vector.shape_cast %1 : vector<2xf32> to vector<2x1xf32>
    %3 = vector.broadcast %2 : vector<2x1xf32> to vector<2x50xf32>
    %4 = arith.subf %0, %3 : vector<2x50xf32>
    %5 = math.exp %4 : vector<2x50xf32>
    %cst_1 = arith.constant dense<0.000000e+00> : vector<2xf32>
    %6 = vector.multi_reduction <add>, %5, %cst_1 [1] : vector<2x50xf32> to vector<2xf32>
    %7 = vector.shape_cast %6 : vector<2xf32> to vector<2x1xf32>
    %8 = vector.broadcast %7 : vector<2x1xf32> to vector<2x50xf32>
    %9 = arith.divf %5, %8 : vector<2x50xf32>
    %c0_2 = arith.constant 0 : index
    %c0_3 = arith.constant 0 : index
    %10 = vector.load %arg2[%c0_2, %c0_3] : memref<2x1xf32, #tpu.memory_space<vmem>>, vector<2x1xf32>
    %c0_4 = arith.constant 0 : index
    %c0_5 = arith.constant 0 : index
    %11 = vector.load %arg3[%c0_4, %c0_5] : memref<2x8xf32, #tpu.memory_space<vmem>>, vector<2x8xf32>
    %cst_6 = arith.constant 1.000000e+00 : f32
    %12 = vector.broadcast %cst_6 : f32 to vector<2x1xf32>
    %13 = arith.subf %12, %10 : vector<2x1xf32>
    %14 = vector.broadcast %13 : vector<2x1xf32> to vector<2x8xf32>
    %15 = arith.mulf %11, %14 : vector<2x8xf32>
    %c0_7 = arith.constant 0 : index
    %c0_8 = arith.constant 0 : index
    %16 = vector.load %arg4[%c0_7, %c0_8] : memref<2x8xi32, #tpu.memory_space<vmem>>, vector<2x8xi32>
    %17 = tpu.iota {dimensions = array<i32: 2>} : vector<2x8x50xi32>
    %18 = vector.shape_cast %16 : vector<2x8xi32> to vector<2x8x1xi32>
    %19 = vector.broadcast %18 : vector<2x8x1xi32> to vector<2x8x50xi32>
    %20 = arith.cmpi eq, %17, %19 : vector<2x8x50xi32>
    %21 = arith.extui %20 : vector<2x8x50xi1> to vector<2x8x50xi32>
    %22 = arith.sitofp %21 : vector<2x8x50xi32> to vector<2x8x50xf32>
    %23 = vector.shape_cast %15 : vector<2x8xf32> to vector<2x8x1xf32>
    %24 = vector.broadcast %23 : vector<2x8x1xf32> to vector<2x8x50xf32>
    %25 = arith.mulf %24, %22 : vector<2x8x50xf32>
    %cst_9 = arith.constant dense<0.000000e+00> : vector<2x50xf32>
    %26 = vector.multi_reduction <add>, %25, %cst_9 [1] : vector<2x8x50xf32> to vector<2x50xf32>
    %27 = vector.broadcast %10 : vector<2x1xf32> to vector<2x50xf32>
    %28 = arith.mulf %27, %9 : vector<2x50xf32>
    %29 = arith.addf %28, %26 : vector<2x50xf32>
    %c0_10 = arith.constant 0 : index
    %c0_11 = arith.constant 0 : index
    %30 = vector.load %arg5[%c0_10, %c0_11] : memref<2x50xf32, #tpu.memory_space<vmem>>, vector<2x50xf32>
    tpu.vector_store %arg5[%c0_10, %c0_11], %29 {strides = array<i32>} : memref<2x50xf32, #tpu.memory_space<vmem>>, vector<2x50xf32>,
    return
  }
  func.func @transform_0(%arg0: i32) -> (i32, i32) {
    %c0_i32 = arith.constant 0 : i32
    %c0_i32_0 = arith.constant 0 : i32
    %c0_i32_1 = arith.constant 0 : i32
    return %c0_i32, %c0_i32_0 : i32, i32
  }
  func.func @transform_1(%arg0: i32) -> (i32, i32) {
    %c0_i32 = arith.constant 0 : i32
    %c0_i32_0 = arith.constant 0 : i32
    %c0_i32_1 = arith.constant 0 : i32
    return %c0_i32, %c0_i32_0 : i32, i32
  }
  func.func @transform_2(%arg0: i32) -> (i32, i32) {
    %c0_i32 = arith.constant 0 : i32
    %c0_i32_0 = arith.constant 0 : i32
    %c0_i32_1 = arith.constant 0 : i32
    return %c0_i32, %c0_i32_0 : i32, i32
  }
  func.func @transform_3(%arg0: i32) -> (i32, i32) {
    %c0_i32 = arith.constant 0 : i32
    %c0_i32_0 = arith.constant 0 : i32
    %c0_i32_1 = arith.constant 0 : i32
    return %c0_i32, %c0_i32_0 : i32, i32
  }
  func.func @transform_4(%arg0: i32) -> (i32, i32) {
    %c0_i32 = arith.constant 0 : i32
    %c0_i32_0 = arith.constant 0 : i32
    %c0_i32_1 = arith.constant 0 : i32
    return %c0_i32, %c0_i32_0 : i32, i32
  }
}

</mosaic_0001>

<llo_original>
// kernel: decoder_forward.9
$region0: #{decoder_forward.9}
  #allocation0 [shape = 'u32[]', space=smem, size = 0x4, offset = 0x4, fixed_abs, tag = 'smem constant byte address 0x4 - core index']
  #allocation1 [shape = 'u32[144,128]{1,0:T(1,128)}', space=vmem, size = 0x12000, scoped, tag = 'internal scratch']
  #allocation2 [shape = 's32[1]{0}', space=sflag, size = 0x4, scoped, tag = 'scoped memory for decoder_forward.9']
  #allocation3 [shape = 'u8[512]{0}', space=smem, size = 0x200, scoped, tag = 'prefetched SMEM operand 0']
  %s0 = inlined_call_operand.vmem [shape: s32[2], index: 0, kind: input, shape index: {}]
  %s1 = inlined_call_operand.vmem [shape: f32[50,1,16], index: 1, kind: input, shape index: {}]
  %s2 = inlined_call_operand.vmem [shape: f32[2,1,16], index: 2, kind: output, shape index: {}]
  %s3 = sld [smem:[#allocation0]]
  $region37: #{decoder_forward.9} parent=0
    _
  %s5 = ssub.s32 1, %s3
  %s6 = scalar_select 0, %s5, %s3
  %s7 = sshll.u32 %s0, 4
  %s8 = int_to_ptr.vmem [resolvable:$true] %s7
  %10 = dma.vmem_to_smem %s8, 16, [#allocation3], [#allocation2]
  %11 = dma.done [#allocation2], 16
  %12 = sfence
  loop: start=0, step=1, limit=4
  $region2: #{decoder_forward.9} parent=0 // loop_pre_header
    _
  $region3: #{decoder_forward.9} parent=0 // loop_header
    %s14 = sphi 0, %s18
    %p15 = scmp.ge.s32.totalorder %s14, 4
    %s26 = sphi 0, %s28
    %s29 = sphi 0, %s26
    %s30 = sphi 0, %s29
    %s46 = sphi 0, %s30
    %s52 = sphi 0, %s54
    %s55 = sphi 0, %s52
    %s56 = sphi 0, %s55
    %s72 = sphi 0, %s56
  $region4: #{decoder_forward.9} parent=0 // loop_header_branch
    %17 = sbr.rel (%p15) target = $region8
  $region5: #{decoder_forward.9} parent=0 // loop_body
    %s19 = ssub.s32 %s14, 1
    %s20 = ssub.s32 %s14, 2
    %s21 = sadd.s32 %s14, 1
    %s22 = sld [smem:[#allocation3 + %s14]]
    %s23 = sld [smem:[#allocation3 + %s21]]
    %s24 = ssub.s32 %s22, %s23
    %p25 = scmp.eq.s32.totalorder %s24, 0
    %s27 = sadd.s32 %s26, 1
    %s28 = scalar_select %p25, %s26, %s27
    %p31 = pneg %p25
    %p32 = scmp.eq.s32.totalorder %s14, 1
    %p33 = por %p31, %p32
    %p34 = scmp.ne.s32.totalorder %s26, %s29
    %p35 = scmp.eq.s32.totalorder %s14, 0
    %p36 = por %p34, %p35
    %p37 = scmp.ne.s32.totalorder %s26, %s29
    %p38 = scmp.eq.s32.totalorder %s19, 1
    %p39 = por %p37, %p38
    %p40 = scmp.ne.s32.totalorder %s29, %s30
    %p41 = scmp.eq.s32.totalorder %s19, 0
    %p42 = por %p40, %p41
    %p43 = scmp.ne.s32.totalorder %s29, %s30
    %p44 = scmp.eq.s32.totalorder %s20, 1
    %p45 = por %p43, %p44
    %p47 = scmp.ne.s32.totalorder %s30, %s46
    %p48 = scmp.eq.s32.totalorder %s20, 0
    %p49 = por %p47, %p48
    %s50 = ssub.s32 %s14, %s21
    %p51 = scmp.eq.s32.totalorder %s50, 0
    %s53 = sadd.s32 %s52, 1
    %s54 = scalar_select %p51, %s52, %s53
    %p57 = pneg %p51
    %p58 = scmp.eq.s32.totalorder %s14, 1
    %p59 = por %p57, %p58
    %p60 = scmp.ne.s32.totalorder %s52, %s55
    %p61 = scmp.eq.s32.totalorder %s14, 0
    %p62 = por %p60, %p61
    %p63 = scmp.ne.s32.totalorder %s52, %s55
    %p64 = scmp.eq.s32.totalorder %s19, 1
    %p65 = por %p63, %p64
    %p66 = scmp.ne.s32.totalorder %s55, %s56
    %p67 = scmp.eq.s32.totalorder %s19, 0
    %p68 = por %p66, %p67
    %p69 = scmp.ne.s32.totalorder %s55, %s56
    %p70 = scmp.eq.s32.totalorder %s20, 1
    %p71 = por %p69, %p70
    %p73 = scmp.ne.s32.totalorder %s56, %s72
    %p74 = scmp.eq.s32.totalorder %s20, 0
    %p75 = por %p73, %p74
    %p76 = scmp.le.s32.totalorder 1, %s14
    %p77 = scmp.lt.s32.totalorder %s14, 3
    %p78 = pnand %p76, %p77
    %p79 = pneg %p78
    // Predicated region
    $region9: #{decoder_forward.9} parent=5 // pred_check
      _
    $region10: #{decoder_forward.9} parent=5 // pred_check_branch
      %81 = sbr.rel (%p78) target = $region12
    $region11: #{decoder_forward.9} parent=5 // pred_region
      %s82 = ssub.s32 %s14, 1
    $region12: #{decoder_forward.9} parent=5 // pred_fallthru
      _
    %p83 = scmp.lt.s32.totalorder %s14, 2
    // Predicated region
    $region13: #{decoder_forward.9} parent=5 // pred_check
      %p84 = pneg %p83
    $region14: #{decoder_forward.9} parent=5 // pred_check_branch
      %86 = sbr.rel (%p84) target = $region16
    $region15: #{decoder_forward.9} parent=5 // pred_region
      // Predicated region
      $region17: #{decoder_forward.9} parent=15 // pred_check
        %p87 = pneg %p36
      $region18: #{decoder_forward.9} parent=15 // pred_check_branch
        %89 = sbr.rel (%p87) target = $region20
      $region19: #{decoder_forward.9} parent=15 // pred_region
        %s90 = sld [smem:[#allocation3 + %s14]]
        %p91 = scmp.lt.s32.totalorder %s90, 49
        %s92 = scalar_select %p91, %s90, 49
        %s93 = scalar_lea.vmem %s1, %s92
        %s94 = sld [smem:[#allocation3 + %s14]]
      $region20: #{decoder_forward.9} parent=15 // pred_fallthru
        _
    $region16: #{decoder_forward.9} parent=5 // pred_fallthru
      _
    %p95 = scmp.le.s32.totalorder 1, %s14
    %p96 = scmp.lt.s32.totalorder %s14, 3
    %p97 = pnand %p95, %p96
    %p98 = pneg %p97
    // Predicated region
    $region21: #{decoder_forward.9} parent=5 // pred_check
      _
    $region22: #{decoder_forward.9} parent=5 // pred_check_branch
      %100 = sbr.rel (%p97) target = $region24
    $region23: #{decoder_forward.9} parent=5 // pred_region
      %s101 = ssub.s32 %s14, 1
      %s102 = sld [smem:[#allocation3 + %s19]]
      %p103 = scmp.lt.s32.totalorder %s102, 49
      %s104 = scalar_select %p103, %s102, 49
      %s105 = scalar_lea.vmem %s1, %s104
      %p106 = pneg %p42
      %p107 = pneg %p39
      %p108 = pneg %p68
      %p109 = pneg %p65
      %p110 = scmp.lt.s32.totalorder %s19, 1
      %s111 = scalar_select %p110, %s19, 1
      %s112 = scalar_lea.vmem %s2, %s111
      %s113 = sld [smem:[#allocation3 + %s19]]
      %p114 = scmp.lt.s32.totalorder %s113, 49
      %s115 = scalar_select %p114, %s113, 49
      %s116 = scalar_lea.vmem %s1, %s115
      %s117 = sld [smem:[#allocation3 + %s19]]
      %p118 = scmp.lt.s32.totalorder %s19, 1
      %s119 = scalar_select %p118, %s19, 1
      %s120 = scalar_lea.vmem %s2, %s119
      %v121 = vld [vmem:[%s116] sm:$0x1]
      %vm122 = vcmask 122880
      %123 = vst.msk [vmem:[%s120] sm:$0x1] %vm122, %v121
      %p124 = scmp.lt.s32.totalorder %s19, 1
      %s125 = scalar_select %p124, %s19, 1
      %s126 = scalar_lea.vmem %s2, %s125
      // Predicated region
      $region25: #{decoder_forward.9} parent=23 // pred_check
        %p127 = pneg %p65
      $region26: #{decoder_forward.9} parent=23 // pred_check_branch
        %129 = sbr.rel (%p127) target = $region28
      $region27: #{decoder_forward.9} parent=23 // pred_region
        _
      $region28: #{decoder_forward.9} parent=23 // pred_fallthru
        _
    $region24: #{decoder_forward.9} parent=5 // pred_fallthru
      _
    %p130 = scmp.le.s32.totalorder 2, %s14
    // Predicated region
    $region29: #{decoder_forward.9} parent=5 // pred_check
      %p131 = pneg %p130
    $region30: #{decoder_forward.9} parent=5 // pred_check_branch
      %133 = sbr.rel (%p131) target = $region32
    $region31: #{decoder_forward.9} parent=5 // pred_region
      %s134 = ssub.s32 %s14, 2
      // Predicated region
      $region33: #{decoder_forward.9} parent=31 // pred_check
        %p135 = pneg %p71
      $region34: #{decoder_forward.9} parent=31 // pred_check_branch
        %137 = sbr.rel (%p135) target = $region36
      $region35: #{decoder_forward.9} parent=31 // pred_region
        %p138 = scmp.lt.s32.totalorder %s20, 1
        %s139 = scalar_select %p138, %s20, 1
        %s140 = scalar_lea.vmem %s2, %s139
      $region36: #{decoder_forward.9} parent=31 // pred_fallthru
        _
    $region32: #{decoder_forward.9} parent=5 // pred_fallthru
      _
  $region6: #{decoder_forward.9} parent=0 // loop_footer
    %s18 = sadd.s32 1, %s14
  $region7: #{decoder_forward.9} parent=0 // loop_footer_branch
    %13 = sbr.rel target = $region3
  $region8: #{decoder_forward.9} parent=0 // loop_exit
    _

// kernel: decoder_forward.10
$region0: #{decoder_forward.10}
  #allocation0 [shape = 'u32[]', space=smem, size = 0x4, offset = 0x4, fixed_abs, tag = 'smem constant byte address 0x4 - core index']
  #allocation1 [shape = 'u32[144,128]{1,0:T(1,128)}', space=vmem, size = 0x12000, scoped, tag = 'internal scratch']
  %s0 = inlined_call_operand.vmem [shape: f32[2,80], index: 0, kind: input, shape index: {}]
  %s1 = inlined_call_operand.vmem [shape: f32[80,16], index: 1, kind: input, shape index: {}]
  %s2 = inlined_call_operand.vmem [shape: f32[1,16], index: 2, kind: input, shape index: {}]
  %s3 = inlined_call_operand.vmem [shape: f32[2,16], index: 3, kind: output, shape index: {}]
  %s4 = sld [smem:[#allocation0]]
  $region22: #{decoder_forward.10} parent=0
    _
  %s6 = ssub.s32 1, %s4
  %s7 = scalar_select 0, %s6, %s4
  // Predicated region
  $region2: #{decoder_forward.10} parent=0 // pred_check
    _
  $region3: #{decoder_forward.10} parent=0 // pred_check_branch
    %9 = sbr.rel (0) target = $region5
  $region4: #{decoder_forward.10} parent=0 // pred_region
    _
  $region5: #{decoder_forward.10} parent=0 // pred_fallthru
    _
  // Predicated region
  $region6: #{decoder_forward.10} parent=0 // pred_check
    _
  $region7: #{decoder_forward.10} parent=0 // pred_check_branch
    %11 = sbr.rel (0) target = $region9
  $region8: #{decoder_forward.10} parent=0 // pred_region
    _
  $region9: #{decoder_forward.10} parent=0 // pred_fallthru
    _
  // Predicated region
  $region10: #{decoder_forward.10} parent=0 // pred_check
    _
  $region11: #{decoder_forward.10} parent=0 // pred_check_branch
    %13 = sbr.rel (0) target = $region13
  $region12: #{decoder_forward.10} parent=0 // pred_region
    _
  $region13: #{decoder_forward.10} parent=0 // pred_fallthru
    _
  %v14 = vld [vmem:[%s0] sm:$0x3]
  %v15 = vld [vmem:[%s1] sm:$0xff]
  %v16 = vld [vmem:[%s1 + $0x8] sm:$0xff]
  %v17 = vld [vmem:[%s1 + $0x10] sm:$0xff]
  %v18 = vld [vmem:[%s1 + $0x18] sm:$0xff]
  %v19 = vld [vmem:[%s1 + $0x20] sm:$0xff]
  %v20 = vld [vmem:[%s1 + $0x28] sm:$0xff]
  %v21 = vld [vmem:[%s1 + $0x30] sm:$0xff]
  %v22 = vld [vmem:[%s1 + $0x38] sm:$0xff]
  %v23 = vld [vmem:[%s1 + $0x40] sm:$0xff]
  %v24 = vld [vmem:[%s1 + $0x48] sm:$0xff]
  %v25 = vld [vmem:[%s2] sm:$0x1]
  %v27 = vlaneseq
  %v28 = vshrl.u32 %v27, 7
  %v29 = vsub.s32 0, %v28
  %v30 = vrot.slane %v25, %v29
  %vm32 = vcmask 654336
  %v34 = vsel %vm32, %v14, 0
  %36 = vmatprep.subr.mxu0 0.0
  %37 = vmatpush1.msra.mxu0 %v15
  %38 = vmatprep.subr.mxu0 0.0
  %39 = vmatpush1.msra.mxu0 %v16
  %40 = vmatprep.subr.mxu0 0.0
  %41 = vmatpush1.msra.mxu0 %v17
  %42 = vmatprep.subr.mxu0 0.0
  %43 = vmatpush1.msra.mxu0 %v18
  %44 = vmatprep.subr.mxu0 0.0
  %45 = vmatpush1.msra.mxu0 %v19
  %46 = vmatprep.subr.mxu0 0.0
  %47 = vmatpush1.msra.mxu0 %v20
  %48 = vmatprep.subr.mxu0 0.0
  %49 = vmatpush1.msra.mxu0 %v21
  %50 = vmatprep.subr.mxu0 0.0
  %51 = vmatpush1.msra.mxu0 %v22
  %52 = vmatprep.subr.mxu0 0.0
  %53 = vmatpush1.msra.mxu0 %v23
  %54 = vmatprep.subr.mxu0 0.0
  %55 = vmatpush1.msra.mxu0 %v24
  %56 = vmatprep.subr.mxu0 0.0
  %57 = vmatpush1.msra.mxu0 0.0
  %58 = vmatprep.subr.mxu0 0.0
  %59 = vmatpush1.msra.mxu0 0.0
  %60 = vmatprep.subr.mxu0 0.0
  %61 = vmatpush1.msra.mxu0 0.0
  %62 = vmatprep.subr.mxu0 0.0
  %63 = vmatpush1.msra.mxu0 0.0
  %64 = vmatprep.subr.mxu0 0.0
  %65 = vmatpush1.msra.mxu0 0.0
  %66 = vmatprep.subr.mxu0 0.0
  %67 = vmatpush1.msra.mxu0 0.0
  %68 = vmatprep.subr.mxu0 0.0
  %69 = vmatpush1.msra.mxu0 0.0
  %70 = vmatprep.subr.mxu0 0.0
  %71 = vmatpush1.msra.mxu0 0.0
  %72 = vmatprep.subr.mxu0 0.0
  %73 = vmatpush1.msra.mxu0 0.0
  %74 = vmatprep.subr.mxu0 0.0
  %75 = vmatpush1.msra.mxu0 0.0
  %76 = vmatprep.subr.mxu0 0.0
  %77 = vmatpush1.msra.mxu0 0.0
  %78 = vmatprep.subr.mxu0 0.0
  %79 = vmatpush1.msra.mxu0 0.0
  %80 = vmatprep.subr.mxu0 0.0
  %81 = vmatpush1.msra.mxu0 0.0
  %82 = vmatprep.subr.mxu0 0.0
  %83 = vmatpush1.msra.mxu0 0.0
  %84 = vmatprep.subr.mxu0 0.0
  %85 = vmatpush1.msra.mxu0 0.0
  %86 = vmatprep.subr.mxu0 0.0
  %87 = vmatpush1.msra.mxu0 0.0
  %88 = vmatprep.subr.mxu0 0.0
  %89 = vmatpush1.msra.mxu0 0.0
  %90 = vmatprep.subr.mxu0 0.0
  %91 = vmatpush1.msra.mxu0 0.0
  %92 = vmatprep.subr.mxu0 0.0
  %93 = vmatpush1.msra.mxu0 0.0
  %94 = vmatprep.subr.mxu0 0.0
  %95 = vmatpush1.msra.mxu0 0.0
  %96 = vmatprep.subr.mxu0 0.0
  %97 = vmatpush1.msra.mxu0 0.0
  %98 = vmatprep.subr.mxu0 0.0
  %99 = vmatpush1.msra.mxu0 0.0
  %100 = vmatprep.mubr.f32.mxu0 0.0
  %101 = vmatmul.mubr.f32.gmra.mrb[0].mxu0 %v34
  %v102 = vpop.f32.mrb[0].mxu0
  %v103 = vadd.f32 %v30, %v102
  %v104 = vpop.f32.mrb[0].mxu0
  %105 = vdwg.mxu0
  %vm106 = vcmask 123904
  %107 = vst.msk [vmem:[%s3] sm:$0x3] %vm106, %v103
  // Predicated region
  $region14: #{decoder_forward.10} parent=0 // pred_check
    _
  $region15: #{decoder_forward.10} parent=0 // pred_check_branch
    %109 = sbr.rel (0) target = $region17
  $region16: #{decoder_forward.10} parent=0 // pred_region
    _
  $region17: #{decoder_forward.10} parent=0 // pred_fallthru
    _
  // Predicated region
  $region18: #{decoder_forward.10} parent=0 // pred_check
    _
  $region19: #{decoder_forward.10} parent=0 // pred_check_branch
    %111 = sbr.rel (0) target = $region21
  $region20: #{decoder_forward.10} parent=0 // pred_region
    _
  $region21: #{decoder_forward.10} parent=0 // pred_fallthru
    _

// kernel: decoder_forward.11
$region0: #{decoder_forward.11}
  #allocation0 [shape = 'u32[]', space=smem, size = 0x4, offset = 0x4, fixed_abs, tag = 'smem constant byte address 0x4 - core index']
  #allocation1 [shape = 'u32[144,128]{1,0:T(1,128)}', space=vmem, size = 0x12000, scoped, tag = 'internal scratch']
  %s0 = inlined_call_operand.vmem [shape: f32[2,16], index: 0, kind: input, shape index: {}]
  %s1 = inlined_call_operand.vmem [shape: f32[2,32], index: 1, kind: input, shape index: {}]
  %s2 = inlined_call_operand.vmem [shape: f32[2,32], index: 2, kind: input, shape index: {}]
  %s3 = inlined_call_operand.vmem [shape: f32[16,128], index: 3, kind: input, shape index: {}]
  %s4 = inlined_call_operand.vmem [shape: f32[32,128], index: 4, kind: input, shape index: {}]
  %s5 = inlined_call_operand.vmem [shape: f32[1,128], index: 5, kind: input, shape index: {}]
  %s6 = inlined_call_operand.vmem [shape: f32[2,32], index: 6, kind: output, shape index: {0}]
  %s7 = inlined_call_operand.vmem [shape: f32[2,32], index: 7, kind: output, shape index: {1}]
  %8 = xla_tuple %s6, %s7
  %s9 = sld [smem:[#allocation0]]
  $region42: #{decoder_forward.11} parent=0
    _
  %s11 = ssub.s32 1, %s9
  %s12 = scalar_select 0, %s11, %s9
  // Predicated region
  $region2: #{decoder_forward.11} parent=0 // pred_check
    _
  $region3: #{decoder_forward.11} parent=0 // pred_check_branch
    %14 = sbr.rel (0) target = $region5
  $region4: #{decoder_forward.11} parent=0 // pred_region
    _
  $region5: #{decoder_forward.11} parent=0 // pred_fallthru
    _
  // Predicated region
  $region6: #{decoder_forward.11} parent=0 // pred_check
    _
  $region7: #{decoder_forward.11} parent=0 // pred_check_branch
    %16 = sbr.rel (0) target = $region9
  $region8: #{decoder_forward.11} parent=0 // pred_region
    _
  $region9: #{decoder_forward.11} parent=0 // pred_fallthru
    _
  // Predicated region
  $region10: #{decoder_forward.11} parent=0 // pred_check
    _
  $region11: #{decoder_forward.11} parent=0 // pred_check_branch
    %18 = sbr.rel (0) target = $region13
  $region12: #{decoder_forward.11} parent=0 // pred_region
    _
  $region13: #{decoder_forward.11} parent=0 // pred_fallthru
    _
  // Predicated region
  $region14: #{decoder_forward.11} parent=0 // pred_check
    _
  $region15: #{decoder_forward.11} parent=0 // pred_check_branch
    %20 = sbr.rel (0) target = $region17
  $region16: #{decoder_forward.11} parent=0 // pred_region
    _
  $region17: #{decoder_forward.11} parent=0 // pred_fallthru
    _
  // Predicated region
  $region18: #{decoder_forward.11} parent=0 // pred_check
    _
  $region19: #{decoder_forward.11} parent=0 // pred_check_branch
    %22 = sbr.rel (0) target = $region21
  $region20: #{decoder_forward.11} parent=0 // pred_region
    _
  $region21: #{decoder_forward.11} parent=0 // pred_fallthru
    _
  // Predicated region
  $region22: #{decoder_forward.11} parent=0 // pred_check
    _
  $region23: #{decoder_forward.11} parent=0 // pred_check_branch
    %24 = sbr.rel (0) target = $region25
  $region24: #{decoder_forward.11} parent=0 // pred_region
    _
  $region25: #{decoder_forward.11} parent=0 // pred_fallthru
    _
  %v25 = vld [vmem:[%s0] sm:$0x3]
  %v26 = vld [vmem:[%s3] sm:$0xff]
  %v27 = vld [vmem:[%s3 + $0x8] sm:$0xff]
  %v28 = vld [vmem:[%s1] sm:$0x3]
  %v29 = vld [vmem:[%s4] sm:$0xff]
  %v30 = vld [vmem:[%s4 + $0x8] sm:$0xff]
  %v31 = vld [vmem:[%s4 + $0x10] sm:$0xff]
  %v32 = vld [vmem:[%s4 + $0x18] sm:$0xff]
  %vm33 = vcmask 261120
  %v35 = vsel %vm33, %v28, 0
  %37 = vmatprep.subr.mxu0 0.0
  %38 = vmatpush1.msra.mxu0 %v29
  %39 = vmatprep.subr.mxu0 0.0
  %40 = vmatpush1.msra.mxu0 %v30
  %41 = vmatprep.subr.mxu0 0.0
  %42 = vmatpush1.msra.mxu0 %v31
  %43 = vmatprep.subr.mxu0 0.0
  %44 = vmatpush1.msra.mxu0 %v32
  %45 = vmatprep.subr.mxu0 0.0
  %46 = vmatpush1.msra.mxu0 0.0
  %47 = vmatprep.subr.mxu0 0.0
  %48 = vmatpush1.msra.mxu0 0.0
  %49 = vmatprep.subr.mxu0 0.0
  %50 = vmatpush1.msra.mxu0 0.0
  %51 = vmatprep.subr.mxu0 0.0
  %52 = vmatpush1.msra.mxu0 0.0
  %53 = vmatprep.subr.mxu0 0.0
  %54 = vmatpush1.msra.mxu0 0.0
  %55 = vmatprep.subr.mxu0 0.0
  %56 = vmatpush1.msra.mxu0 0.0
  %57 = vmatprep.subr.mxu0 0.0
  %58 = vmatpush1.msra.mxu0 0.0
  %59 = vmatprep.subr.mxu0 0.0
  %60 = vmatpush1.msra.mxu0 0.0
  %61 = vmatprep.subr.mxu0 0.0
  %62 = vmatpush1.msra.mxu0 0.0
  %63 = vmatprep.subr.mxu0 0.0
  %64 = vmatpush1.msra.mxu0 0.0
  %65 = vmatprep.subr.mxu0 0.0
  %66 = vmatpush1.msra.mxu0 0.0
  %67 = vmatprep.subr.mxu0 0.0
  %68 = vmatpush1.msra.mxu0 0.0
  %69 = vmatprep.subr.mxu0 0.0
  %70 = vmatpush1.msra.mxu0 0.0
  %71 = vmatprep.subr.mxu0 0.0
  %72 = vmatpush1.msra.mxu0 0.0
  %73 = vmatprep.subr.mxu0 0.0
  %74 = vmatpush1.msra.mxu0 0.0
  %75 = vmatprep.subr.mxu0 0.0
  %76 = vmatpush1.msra.mxu0 0.0
  %77 = vmatprep.subr.mxu0 0.0
  %78 = vmatpush1.msra.mxu0 0.0
  %79 = vmatprep.subr.mxu0 0.0
  %80 = vmatpush1.msra.mxu0 0.0
  %81 = vmatprep.subr.mxu0 0.0
  %82 = vmatpush1.msra.mxu0 0.0
  %83 = vmatprep.subr.mxu0 0.0
  %84 = vmatpush1.msra.mxu0 0.0
  %85 = vmatprep.subr.mxu0 0.0
  %86 = vmatpush1.msra.mxu0 0.0
  %87 = vmatprep.subr.mxu0 0.0
  %88 = vmatpush1.msra.mxu0 0.0
  %89 = vmatprep.subr.mxu0 0.0
  %90 = vmatpush1.msra.mxu0 0.0
  %91 = vmatprep.subr.mxu0 0.0
  %92 = vmatpush1.msra.mxu0 0.0
  %93 = vmatprep.subr.mxu0 0.0
  %94 = vmatpush1.msra.mxu0 0.0
  %95 = vmatprep.subr.mxu0 0.0
  %96 = vmatpush1.msra.mxu0 0.0
  %97 = vmatprep.subr.mxu0 0.0
  %98 = vmatpush1.msra.mxu0 0.0
  %99 = vmatprep.subr.mxu0 0.0
  %100 = vmatpush1.msra.mxu0 0.0
  %101 = vmatprep.mubr.f32.mxu0 0.0
  %102 = vmatmul.mubr.f32.gmra.mrb[0].mxu0 %v35
  %v103 = vpop.f32.mrb[0].mxu0
  %v104 = vadd.f32 0.0, %v103
  %v105 = vpop.f32.mrb[0].mxu0
  %106 = vdwg.mxu0
  %vm107 = vcmask 130048
  %v109 = vsel %vm107, %v25, 0
  %111 = vmatprep.subr.mxu0 0.0
  %112 = vmatpush1.msra.mxu0 %v26
  %113 = vmatprep.subr.mxu0 0.0
  %114 = vmatpush1.msra.mxu0 %v27
  %115 = vmatprep.subr.mxu0 0.0
  %116 = vmatpush1.msra.mxu0 0.0
  %117 = vmatprep.subr.mxu0 0.0
  %118 = vmatpush1.msra.mxu0 0.0
  %119 = vmatprep.subr.mxu0 0.0
  %120 = vmatpush1.msra.mxu0 0.0
  %121 = vmatprep.subr.mxu0 0.0
  %122 = vmatpush1.msra.mxu0 0.0
  %123 = vmatprep.subr.mxu0 0.0
  %124 = vmatpush1.msra.mxu0 0.0
  %125 = vmatprep.subr.mxu0 0.0
  %126 = vmatpush1.msra.mxu0 0.0
  %127 = vmatprep.subr.mxu0 0.0
  %128 = vmatpush1.msra.mxu0 0.0
  %129 = vmatprep.subr.mxu0 0.0
  %130 = vmatpush1.msra.mxu0 0.0
  %131 = vmatprep.subr.mxu0 0.0
  %132 = vmatpush1.msra.mxu0 0.0
  %133 = vmatprep.subr.mxu0 0.0
  %134 = vmatpush1.msra.mxu0 0.0
  %135 = vmatprep.subr.mxu0 0.0
  %136 = vmatpush1.msra.mxu0 0.0
  %137 = vmatprep.subr.mxu0 0.0
  %138 = vmatpush1.msra.mxu0 0.0
  %139 = vmatprep.subr.mxu0 0.0
  %140 = vmatpush1.msra.mxu0 0.0
  %141 = vmatprep.subr.mxu0 0.0
  %142 = vmatpush1.msra.mxu0 0.0
  %143 = vmatprep.subr.mxu0 0.0
  %144 = vmatpush1.msra.mxu0 0.0
  %145 = vmatprep.subr.mxu0 0.0
  %146 = vmatpush1.msra.mxu0 0.0
  %147 = vmatprep.subr.mxu0 0.0
  %148 = vmatpush1.msra.mxu0 0.0
  %149 = vmatprep.subr.mxu0 0.0
  %150 = vmatpush1.msra.mxu0 0.0
  %151 = vmatprep.subr.mxu0 0.0
  %152 = vmatpush1.msra.mxu0 0.0
  %153 = vmatprep.subr.mxu0 0.0
  %154 = vmatpush1.msra.mxu0 0.0
  %155 = vmatprep.subr.mxu0 0.0
  %156 = vmatpush1.msra.mxu0 0.0
  %157 = vmatprep.subr.mxu0 0.0
  %158 = vmatpush1.msra.mxu0 0.0
  %159 = vmatprep.subr.mxu0 0.0
  %160 = vmatpush1.msra.mxu0 0.0
  %161 = vmatprep.subr.mxu0 0.0
  %162 = vmatpush1.msra.mxu0 0.0
  %163 = vmatprep.subr.mxu0 0.0
  %164 = vmatpush1.msra.mxu0 0.0
  %165 = vmatprep.subr.mxu0 0.0
  %166 = vmatpush1.msra.mxu0 0.0
  %167 = vmatprep.subr.mxu0 0.0
  %168 = vmatpush1.msra.mxu0 0.0
  %169 = vmatprep.subr.mxu0 0.0
  %170 = vmatpush1.msra.mxu0 0.0
  %171 = vmatprep.subr.mxu0 0.0
  %172 = vmatpush1.msra.mxu0 0.0
  %173 = vmatprep.subr.mxu0 0.0
  %174 = vmatpush1.msra.mxu0 0.0
  %175 = vmatprep.mubr.f32.mxu0 0.0
  %176 = vmatmul.mubr.f32.gmra.mrb[0].mxu0 %v109
  %v177 = vpop.f32.mrb[0].mxu0
  %v178 = vadd.f32 %v104, %v177
  %v179 = vpop.f32.mrb[0].mxu0
  %180 = vdwg.mxu0
  %v181 = vld [vmem:[%s5] sm:$0x1]
  %v183 = vlaneseq
  %v184 = vshrl.u32 %v183, 7
  %v185 = vsub.s32 0, %v184
  %v186 = vrot.slane %v181, %v185
  %v188 = vadd.f32 %v178, %v186
  %v189 = vsub.f32 0.0, %v188
  %v190 = vmul.f32 %v189, 1.442695
  %v191 = vpow.pop %v190
  %v192 = vadd.f32 %v191, 1.0
  %v193 = vrcp.pop %v192
  %v194 = vmul.f32 1.0, %v193
  %v195 = vtanh.pop %v188
  %v196 = vld [vmem:[%s2] sm:$0x3]
  %198 = vrot.lane.b32.xlu0 %v196, 32
  %v199 = vpop.permute.xlu0 %198
  %v201 = vmul.f32 %v194, %v199
  %203 = vrot.lane.b32.xlu0 %v195, 64
  %v204 = vpop.permute.xlu0 %203
  %v206 = vmul.f32 %v194, %v204
  %208 = vrot.lane.b32.xlu0 %v206, 32
  %v209 = vpop.permute.xlu0 %208
  %v211 = vadd.f32 %v201, %v209
  %v212 = vtanh.pop %v211
  %214 = vrot.lane.b32.xlu0 %v212, 64
  %v215 = vpop.permute.xlu0 %214
  %v217 = vmul.f32 %v194, %v215
  %219 = vrot.lane.b32.xlu0 %v211, 96
  %v220 = vpop.permute.xlu0 %219
  %vm222 = vcmask 254976
  %223 = vst.msk [vmem:[%s7] sm:$0x3] %vm222, %v220
  %225 = vrot.lane.b32.xlu0 %v217, 32
  %v226 = vpop.permute.xlu0 %225
  %228 = vst.msk [vmem:[%s6] sm:$0x3] %vm222, %v226
  // Predicated region
  $region26: #{decoder_forward.11} parent=0 // pred_check
    _
  $region27: #{decoder_forward.11} parent=0 // pred_check_branch
    %230 = sbr.rel (0) target = $region29
  $region28: #{decoder_forward.11} parent=0 // pred_region
    _
  $region29: #{decoder_forward.11} parent=0 // pred_fallthru
    _
  // Predicated region
  $region30: #{decoder_forward.11} parent=0 // pred_check
    _
  $region31: #{decoder_forward.11} parent=0 // pred_check_branch
    %232 = sbr.rel (0) target = $region33
  $region32: #{decoder_forward.11} parent=0 // pred_region
    _
  $region33: #{decoder_forward.11} parent=0 // pred_fallthru
    _
  // Predicated region
  $region34: #{decoder_forward.11} parent=0 // pred_check
    _
  $region35: #{decoder_forward.11} parent=0 // pred_check_branch
    %234 = sbr.rel (0) target = $region37
  $region36: #{decoder_forward.11} parent=0 // pred_region
    _
  $region37: #{decoder_forward.11} parent=0 // pred_fallthru
    _
  // Predicated region
  $region38: #{decoder_forward.11} parent=0 // pred_check
    _
  $region39: #{decoder_forward.11} parent=0 // pred_check_branch
    %236 = sbr.rel (0) target = $region41
  $region40: #{decoder_forward.11} parent=0 // pred_region
    _
  $region41: #{decoder_forward.11} parent=0 // pred_fallthru
    _

// kernel: decoder_forward.13
$region0: #{decoder_forward.13}
  #allocation0 [shape = 'u32[]', space=smem, size = 0x4, offset = 0x4, fixed_abs, tag = 'smem constant byte address 0x4 - core index']
  #allocation1 [shape = 'u32[144,128]{1,0:T(1,128)}', space=vmem, size = 0x12000, scoped, tag = 'internal scratch']
  %s0 = inlined_call_operand.vmem [shape: f32[2,1,64], index: 0, kind: input, shape index: {}]
  %s1 = inlined_call_operand.vmem [shape: f32[2,8,64], index: 1, kind: input, shape index: {}]
  %s2 = inlined_call_operand.vmem [shape: f32[2,8,64], index: 2, kind: input, shape index: {}]
  %s3 = inlined_call_operand.vmem [shape: f32[1,64], index: 3, kind: input, shape index: {}]
  %s4 = inlined_call_operand.vmem [shape: f32[1,64], index: 4, kind: input, shape index: {}]
  %s5 = inlined_call_operand.vmem [shape: f32[2,8,1], index: 5, kind: input, shape index: {}]
  %s6 = inlined_call_operand.vmem [shape: f32[2,8,1], index: 6, kind: input, shape index: {}]
  %s7 = inlined_call_operand.vmem [shape: f32[2,1,64], index: 7, kind: output, shape index: {0}]
  %s8 = inlined_call_operand.vmem [shape: f32[2,8,1], index: 8, kind: output, shape index: {1}]
  %s9 = inlined_call_operand.vmem [shape: f32[2,8,1], index: 9, kind: output, shape index: {2}]
  %10 = xla_tuple %s7, %s8, %s9
  %s11 = sld [smem:[#allocation0]]
  $region77: #{decoder_forward.13} parent=0
    _
  %s13 = ssub.s32 1, %s11
  %s14 = scalar_select 0, %s13, %s11
  loop: start=0, step=1, limit=4
  $region2: #{decoder_forward.13} parent=0 // loop_pre_header
    _
  $region3: #{decoder_forward.13} parent=0 // loop_header
    %s16 = sphi 0, %s20
    %p17 = scmp.ge.s32.totalorder %s16, 4
    %s26 = sphi 0, %s28
    %s29 = sphi 0, %s26
    %s30 = sphi 0, %s29
    %s46 = sphi 0, %s30
    %s52 = sphi 0, %s54
    %s55 = sphi 0, %s52
    %s56 = sphi 0, %s55
    %s72 = sphi 0, %s56
    %s78 = sphi 0, %s80
    %s81 = sphi 0, %s78
    %s82 = sphi 0, %s81
    %s98 = sphi 0, %s82
    %s102 = sphi 0, %s102
    %s104 = sphi 0, %s102
    %s105 = sphi 0, %s104
    %s119 = sphi 0, %s105
    %s123 = sphi 0, %s123
    %s125 = sphi 0, %s123
    %s126 = sphi 0, %s125
    %s140 = sphi 0, %s126
    %s146 = sphi 0, %s148
    %s149 = sphi 0, %s146
    %s150 = sphi 0, %s149
    %s166 = sphi 0, %s150
    %s172 = sphi 0, %s174
    %s175 = sphi 0, %s172
    %s176 = sphi 0, %s175
    %s192 = sphi 0, %s176
    %s198 = sphi 0, %s200
    %s201 = sphi 0, %s198
    %s202 = sphi 0, %s201
    %s218 = sphi 0, %s202
    %s224 = sphi 0, %s226
    %s227 = sphi 0, %s224
    %s228 = sphi 0, %s227
    %s244 = sphi 0, %s228
    %s250 = sphi 0, %s252
    %s253 = sphi 0, %s250
    %s254 = sphi 0, %s253
    %s270 = sphi 0, %s254
  $region4: #{decoder_forward.13} parent=0 // loop_header_branch
    %19 = sbr.rel (%p17) target = $region8
  $region5: #{decoder_forward.13} parent=0 // loop_body
    %s21 = ssub.s32 %s16, 1
    %s22 = ssub.s32 %s16, 2
    %s23 = sadd.s32 %s16, 1
    %s24 = ssub.s32 %s16, %s23
    %p25 = scmp.eq.s32.totalorder %s24, 0
    %s27 = sadd.s32 %s26, 1
    %s28 = scalar_select %p25, %s26, %s27
    %p31 = pneg %p25
    %p32 = scmp.eq.s32.totalorder %s16, 1
    %p33 = por %p31, %p32
    %p34 = scmp.ne.s32.totalorder %s26, %s29
    %p35 = scmp.eq.s32.totalorder %s16, 0
    %p36 = por %p34, %p35
    %p37 = scmp.ne.s32.totalorder %s26, %s29
    %p38 = scmp.eq.s32.totalorder %s21, 1
    %p39 = por %p37, %p38
    %p40 = scmp.ne.s32.totalorder %s29, %s30
    %p41 = scmp.eq.s32.totalorder %s21, 0
    %p42 = por %p40, %p41
    %p43 = scmp.ne.s32.totalorder %s29, %s30
    %p44 = scmp.eq.s32.totalorder %s22, 1
    %p45 = por %p43, %p44
    %p47 = scmp.ne.s32.totalorder %s30, %s46
    %p48 = scmp.eq.s32.totalorder %s22, 0
    %p49 = por %p47, %p48
    %s50 = ssub.s32 %s16, %s23
    %p51 = scmp.eq.s32.totalorder %s50, 0
    %s53 = sadd.s32 %s52, 1
    %s54 = scalar_select %p51, %s52, %s53
    %p57 = pneg %p51
    %p58 = scmp.eq.s32.totalorder %s16, 1
    %p59 = por %p57, %p58
    %p60 = scmp.ne.s32.totalorder %s52, %s55
    %p61 = scmp.eq.s32.totalorder %s16, 0
    %p62 = por %p60, %p61
    %p63 = scmp.ne.s32.totalorder %s52, %s55
    %p64 = scmp.eq.s32.totalorder %s21, 1
    %p65 = por %p63, %p64
    %p66 = scmp.ne.s32.totalorder %s55, %s56
    %p67 = scmp.eq.s32.totalorder %s21, 0
    %p68 = por %p66, %p67
    %p69 = scmp.ne.s32.totalorder %s55, %s56
    %p70 = scmp.eq.s32.totalorder %s22, 1
    %p71 = por %p69, %p70
    %p73 = scmp.ne.s32.totalorder %s56, %s72
    %p74 = scmp.eq.s32.totalorder %s22, 0
    %p75 = por %p73, %p74
    %s76 = ssub.s32 %s16, %s23
    %p77 = scmp.eq.s32.totalorder %s76, 0
    %s79 = sadd.s32 %s78, 1
    %s80 = scalar_select %p77, %s78, %s79
    %p83 = pneg %p77
    %p84 = scmp.eq.s32.totalorder %s16, 1
    %p85 = por %p83, %p84
    %p86 = scmp.ne.s32.totalorder %s78, %s81
    %p87 = scmp.eq.s32.totalorder %s16, 0
    %p88 = por %p86, %p87
    %p89 = scmp.ne.s32.totalorder %s78, %s81
    %p90 = scmp.eq.s32.totalorder %s21, 1
    %p91 = por %p89, %p90
    %p92 = scmp.ne.s32.totalorder %s81, %s82
    %p93 = scmp.eq.s32.totalorder %s21, 0
    %p94 = por %p92, %p93
    %p95 = scmp.ne.s32.totalorder %s81, %s82
    %p96 = scmp.eq.s32.totalorder %s22, 1
    %p97 = por %p95, %p96
    %p99 = scmp.ne.s32.totalorder %s82, %s98
    %p100 = scmp.eq.s32.totalorder %s22, 0
    %p101 = por %p99, %p100
    %s103 = sadd.s32 %s102, 1
    %p106 = scmp.eq.s32.totalorder %s16, 1
    %p107 = scmp.ne.s32.totalorder %s102, %s104
    %p108 = scmp.eq.s32.totalorder %s16, 0
    %p109 = por %p107, %p108
    %p110 = scmp.ne.s32.totalorder %s102, %s104
    %p111 = scmp.eq.s32.totalorder %s21, 1
    %p112 = por %p110, %p111
    %p113 = scmp.ne.s32.totalorder %s104, %s105
    %p114 = scmp.eq.s32.totalorder %s21, 0
    %p115 = por %p113, %p114
    %p116 = scmp.ne.s32.totalorder %s104, %s105
    %p117 = scmp.eq.s32.totalorder %s22, 1
    %p118 = por %p116, %p117
    %p120 = scmp.ne.s32.totalorder %s105, %s119
    %p121 = scmp.eq.s32.totalorder %s22, 0
    %p122 = por %p120, %p121
    %s124 = sadd.s32 %s123, 1
    %p127 = scmp.eq.s32.totalorder %s16, 1
    %p128 = scmp.ne.s32.totalorder %s123, %s125
    %p129 = scmp.eq.s32.totalorder %s16, 0
    %p130 = por %p128, %p129
    %p131 = scmp.ne.s32.totalorder %s123, %s125
    %p132 = scmp.eq.s32.totalorder %s21, 1
    %p133 = por %p131, %p132
    %p134 = scmp.ne.s32.totalorder %s125, %s126
    %p135 = scmp.eq.s32.totalorder %s21, 0
    %p136 = por %p134, %p135
    %p137 = scmp.ne.s32.totalorder %s125, %s126
    %p138 = scmp.eq.s32.totalorder %s22, 1
    %p139 = por %p137, %p138
    %p141 = scmp.ne.s32.totalorder %s126, %s140
    %p142 = scmp.eq.s32.totalorder %s22, 0
    %p143 = por %p141, %p142
    %s144 = ssub.s32 %s16, %s23
    %p145 = scmp.eq.s32.totalorder %s144, 0
    %s147 = sadd.s32 %s146, 1
    %s148 = scalar_select %p145, %s146, %s147
    %p151 = pneg %p145
    %p152 = scmp.eq.s32.totalorder %s16, 1
    %p153 = por %p151, %p152
    %p154 = scmp.ne.s32.totalorder %s146, %s149
    %p155 = scmp.eq.s32.totalorder %s16, 0
    %p156 = por %p154, %p155
    %p157 = scmp.ne.s32.totalorder %s146, %s149
    %p158 = scmp.eq.s32.totalorder %s21, 1
    %p159 = por %p157, %p158
    %p160 = scmp.ne.s32.totalorder %s149, %s150
    %p161 = scmp.eq.s32.totalorder %s21, 0
    %p162 = por %p160, %p161
    %p163 = scmp.ne.s32.totalorder %s149, %s150
    %p164 = scmp.eq.s32.totalorder %s22, 1
    %p165 = por %p163, %p164
    %p167 = scmp.ne.s32.totalorder %s150, %s166
    %p168 = scmp.eq.s32.totalorder %s22, 0
    %p169 = por %p167, %p168
    %s170 = ssub.s32 %s16, %s23
    %p171 = scmp.eq.s32.totalorder %s170, 0
    %s173 = sadd.s32 %s172, 1
    %s174 = scalar_select %p171, %s172, %s173
    %p177 = pneg %p171
    %p178 = scmp.eq.s32.totalorder %s16, 1
    %p179 = por %p177, %p178
    %p180 = scmp.ne.s32.totalorder %s172, %s175
    %p181 = scmp.eq.s32.totalorder %s16, 0
    %p182 = por %p180, %p181
    %p183 = scmp.ne.s32.totalorder %s172, %s175
    %p184 = scmp.eq.s32.totalorder %s21, 1
    %p185 = por %p183, %p184
    %p186 = scmp.ne.s32.totalorder %s175, %s176
    %p187 = scmp.eq.s32.totalorder %s21, 0
    %p188 = por %p186, %p187
    %p189 = scmp.ne.s32.totalorder %s175, %s176
    %p190 = scmp.eq.s32.totalorder %s22, 1
    %p191 = por %p189, %p190
    %p193 = scmp.ne.s32.totalorder %s176, %s192
    %p194 = scmp.eq.s32.totalorder %s22, 0
    %p195 = por %p193, %p194
    %s196 = ssub.s32 %s16, %s23
    %p197 = scmp.eq.s32.totalorder %s196, 0
    %s199 = sadd.s32 %s198, 1
    %s200 = scalar_select %p197, %s198, %s199
    %p203 = pneg %p197
    %p204 = scmp.eq.s32.totalorder %s16, 1
    %p205 = por %p203, %p204
    %p206 = scmp.ne.s32.totalorder %s198, %s201
    %p207 = scmp.eq.s32.totalorder %s16, 0
    %p208 = por %p206, %p207
    %p209 = scmp.ne.s32.totalorder %s198, %s201
    %p210 = scmp.eq.s32.totalorder %s21, 1
    %p211 = por %p209, %p210
    %p212 = scmp.ne.s32.totalorder %s201, %s202
    %p213 = scmp.eq.s32.totalorder %s21, 0
    %p214 = por %p212, %p213
    %p215 = scmp.ne.s32.totalorder %s201, %s202
    %p216 = scmp.eq.s32.totalorder %s22, 1
    %p217 = por %p215, %p216
    %p219 = scmp.ne.s32.totalorder %s202, %s218
    %p220 = scmp.eq.s32.totalorder %s22, 0
    %p221 = por %p219, %p220
    %s222 = ssub.s32 %s16, %s23
    %p223 = scmp.eq.s32.totalorder %s222, 0
    %s225 = sadd.s32 %s224, 1
    %s226 = scalar_select %p223, %s224, %s225
    %p229 = pneg %p223
    %p230 = scmp.eq.s32.totalorder %s16, 1
    %p231 = por %p229, %p230
    %p232 = scmp.ne.s32.totalorder %s224, %s227
    %p233 = scmp.eq.s32.totalorder %s16, 0
    %p234 = por %p232, %p233
    %p235 = scmp.ne.s32.totalorder %s224, %s227
    %p236 = scmp.eq.s32.totalorder %s21, 1
    %p237 = por %p235, %p236
    %p238 = scmp.ne.s32.totalorder %s227, %s228
    %p239 = scmp.eq.s32.totalorder %s21, 0
    %p240 = por %p238, %p239
    %p241 = scmp.ne.s32.totalorder %s227, %s228
    %p242 = scmp.eq.s32.totalorder %s22, 1
    %p243 = por %p241, %p242
    %p245 = scmp.ne.s32.totalorder %s228, %s244
    %p246 = scmp.eq.s32.totalorder %s22, 0
    %p247 = por %p245, %p246
    %s248 = ssub.s32 %s16, %s23
    %p249 = scmp.eq.s32.totalorder %s248, 0
    %s251 = sadd.s32 %s250, 1
    %s252 = scalar_select %p249, %s250, %s251
    %p255 = pneg %p249
    %p256 = scmp.eq.s32.totalorder %s16, 1
    %p257 = por %p255, %p256
    %p258 = scmp.ne.s32.totalorder %s250, %s253
    %p259 = scmp.eq.s32.totalorder %s16, 0
    %p260 = por %p258, %p259
    %p261 = scmp.ne.s32.totalorder %s250, %s253
    %p262 = scmp.eq.s32.totalorder %s21, 1
    %p263 = por %p261, %p262
    %p264 = scmp.ne.s32.totalorder %s253, %s254
    %p265 = scmp.eq.s32.totalorder %s21, 0
    %p266 = por %p264, %p265
    %p267 = scmp.ne.s32.totalorder %s253, %s254
    %p268 = scmp.eq.s32.totalorder %s22, 1
    %p269 = por %p267, %p268
    %p271 = scmp.ne.s32.totalorder %s254, %s270
    %p272 = scmp.eq.s32.totalorder %s22, 0
    %p273 = por %p271, %p272
    %p274 = scmp.le.s32.totalorder 1, %s16
    %p275 = scmp.lt.s32.totalorder %s16, 3
    %p276 = pnand %p274, %p275
    %p277 = pneg %p276
    // Predicated region
    $region9: #{decoder_forward.13} parent=5 // pred_check
      _
    $region10: #{decoder_forward.13} parent=5 // pred_check_branch
      %279 = sbr.rel (%p276) target = $region12
    $region11: #{decoder_forward.13} parent=5 // pred_region
      %s280 = ssub.s32 %s16, 1
      // Predicated region
      $region13: #{decoder_forward.13} parent=11 // pred_check
        %p281 = pneg %p115
      $region14: #{decoder_forward.13} parent=11 // pred_check_branch
        %283 = sbr.rel (%p281) target = $region16
      $region15: #{decoder_forward.13} parent=11 // pred_region
        _
      $region16: #{decoder_forward.13} parent=11 // pred_fallthru
        _
      // Predicated region
      $region17: #{decoder_forward.13} parent=11 // pred_check
        %p284 = pneg %p136
      $region18: #{decoder_forward.13} parent=11 // pred_check_branch
        %286 = sbr.rel (%p284) target = $region20
      $region19: #{decoder_forward.13} parent=11 // pred_region
        _
      $region20: #{decoder_forward.13} parent=11 // pred_fallthru
        _
    $region12: #{decoder_forward.13} parent=5 // pred_fallthru
      _
    %p287 = scmp.lt.s32.totalorder %s16, 2
    // Predicated region
    $region21: #{decoder_forward.13} parent=5 // pred_check
      %p288 = pneg %p287
    $region22: #{decoder_forward.13} parent=5 // pred_check_branch
      %290 = sbr.rel (%p288) target = $region24
    $region23: #{decoder_forward.13} parent=5 // pred_region
      // Predicated region
      $region25: #{decoder_forward.13} parent=23 // pred_check
        %p291 = pneg %p36
      $region26: #{decoder_forward.13} parent=23 // pred_check_branch
        %293 = sbr.rel (%p291) target = $region28
      $region27: #{decoder_forward.13} parent=23 // pred_region
        %p294 = scmp.lt.s32.totalorder %s16, 1
        %s295 = scalar_select %p294, %s16, 1
        %s296 = scalar_lea.vmem %s0, %s295
      $region28: #{decoder_forward.13} parent=23 // pred_fallthru
        _
      // Predicated region
      $region29: #{decoder_forward.13} parent=23 // pred_check
        %p297 = pneg %p62
      $region30: #{decoder_forward.13} parent=23 // pred_check_branch
        %299 = sbr.rel (%p297) target = $region32
      $region31: #{decoder_forward.13} parent=23 // pred_region
        %p300 = scmp.lt.s32.totalorder %s16, 1
        %s301 = scalar_select %p300, %s16, 1
        %s302 = smul.addr %s301, 8
        %s303 = scalar_lea.vmem %s1, %s302
      $region32: #{decoder_forward.13} parent=23 // pred_fallthru
        _
      // Predicated region
      $region33: #{decoder_forward.13} parent=23 // pred_check
        %p304 = pneg %p88
      $region34: #{decoder_forward.13} parent=23 // pred_check_branch
        %306 = sbr.rel (%p304) target = $region36
      $region35: #{decoder_forward.13} parent=23 // pred_region
        %p307 = scmp.lt.s32.totalorder %s16, 1
        %s308 = scalar_select %p307, %s16, 1
        %s309 = smul.addr %s308, 8
        %s310 = scalar_lea.vmem %s2, %s309
      $region36: #{decoder_forward.13} parent=23 // pred_fallthru
        _
      // Predicated region
      $region37: #{decoder_forward.13} parent=23 // pred_check
        %p311 = pneg %p156
      $region38: #{decoder_forward.13} parent=23 // pred_check_branch
        %313 = sbr.rel (%p311) target = $region40
      $region39: #{decoder_forward.13} parent=23 // pred_region
        %p314 = scmp.lt.s32.totalorder %s16, 1
        %s315 = scalar_select %p314, %s16, 1
        %s316 = smul.addr %s315, 8
        %s317 = scalar_lea.vmem %s5, %s316
      $region40: #{decoder_forward.13} parent=23 // pred_fallthru
        _
      // Predicated region
      $region41: #{decoder_forward.13} parent=23 // pred_check
        %p318 = pneg %p182
      $region42: #{decoder_forward.13} parent=23 // pred_check_branch
        %320 = sbr.rel (%p318) target = $region44
      $region43: #{decoder_forward.13} parent=23 // pred_region
        %p321 = scmp.lt.s32.totalorder %s16, 1
        %s322 = scalar_select %p321, %s16, 1
        %s323 = smul.addr %s322, 8
        %s324 = scalar_lea.vmem %s6, %s323
      $region44: #{decoder_forward.13} parent=23 // pred_fallthru
        _
    $region24: #{decoder_forward.13} parent=5 // pred_fallthru
      _
    %p325 = scmp.le.s32.totalorder 1, %s16
    %p326 = scmp.lt.s32.totalorder %s16, 3
    %p327 = pnand %p325, %p326
    %p328 = pneg %p327
    // Predicated region
    $region45: #{decoder_forward.13} parent=5 // pred_check
      _
    $region46: #{decoder_forward.13} parent=5 // pred_check_branch
      %330 = sbr.rel (%p327) target = $region48
    $region47: #{decoder_forward.13} parent=5 // pred_region
      %s331 = ssub.s32 %s16, 1
      %p332 = scmp.lt.s32.totalorder %s21, 1
      %s333 = scalar_select %p332, %s21, 1
      %s334 = scalar_lea.vmem %s0, %s333
      %p335 = pneg %p42
      %p336 = pneg %p39
      %p337 = scmp.lt.s32.totalorder %s21, 1
      %s338 = scalar_select %p337, %s21, 1
      %s339 = smul.addr %s338, 8
      %s340 = scalar_lea.vmem %s1, %s339
      %p341 = pneg %p68
      %p342 = pneg %p65
      %p343 = scmp.lt.s32.totalorder %s21, 1
      %s344 = scalar_select %p343, %s21, 1
      %s345 = smul.addr %s344, 8
      %s346 = scalar_lea.vmem %s2, %s345
      %p347 = pneg %p94
      %p348 = pneg %p91
      %p349 = pneg %p115
      %p350 = pneg %p112
      %p351 = pneg %p136
      %p352 = pneg %p133
      %p353 = scmp.lt.s32.totalorder %s21, 1
      %s354 = scalar_select %p353, %s21, 1
      %s355 = smul.addr %s354, 8
      %s356 = scalar_lea.vmem %s5, %s355
      %p357 = pneg %p162
      %p358 = pneg %p159
      %p359 = scmp.lt.s32.totalorder %s21, 1
      %s360 = scalar_select %p359, %s21, 1
      %s361 = smul.addr %s360, 8
      %s362 = scalar_lea.vmem %s6, %s361
      %p363 = pneg %p188
      %p364 = pneg %p185
      %p365 = pneg %p214
      %p366 = pneg %p211
      %p367 = scmp.lt.s32.totalorder %s21, 1
      %s368 = scalar_select %p367, %s21, 1
      %s369 = scalar_lea.vmem %s7, %s368
      %p370 = pneg %p240
      %p371 = pneg %p237
      %p372 = scmp.lt.s32.totalorder %s21, 1
      %s373 = scalar_select %p372, %s21, 1
      %s374 = smul.addr %s373, 8
      %s375 = scalar_lea.vmem %s8, %s374
      %p376 = pneg %p266
      %p377 = pneg %p263
      %p378 = scmp.lt.s32.totalorder %s21, 1
      %s379 = scalar_select %p378, %s21, 1
      %s380 = smul.addr %s379, 8
      %s381 = scalar_lea.vmem %s9, %s380
      %p382 = scmp.lt.s32.totalorder %s21, 1
      %s383 = scalar_select %p382, %s21, 1
      %s384 = scalar_lea.vmem %s0, %s383
      %p385 = scmp.lt.s32.totalorder %s21, 1
      %s386 = scalar_select %p385, %s21, 1
      %s387 = smul.addr %s386, 8
      %s388 = scalar_lea.vmem %s1, %s387
      %p389 = scmp.lt.s32.totalorder %s21, 1
      %s390 = scalar_select %p389, %s21, 1
      %s391 = smul.addr %s390, 8
      %s392 = scalar_lea.vmem %s2, %s391
      %p393 = scmp.lt.s32.totalorder %s21, 1
      %s394 = scalar_select %p393, %s21, 1
      %s395 = smul.addr %s394, 8
      %s396 = scalar_lea.vmem %s5, %s395
      %p397 = scmp.lt.s32.totalorder %s21, 1
      %s398 = scalar_select %p397, %s21, 1
      %s399 = smul.addr %s398, 8
      %s400 = scalar_lea.vmem %s6, %s399
      %p401 = scmp.lt.s32.totalorder %s21, 1
      %s402 = scalar_select %p401, %s21, 1
      %s403 = scalar_lea.vmem %s7, %s402
      %p404 = scmp.lt.s32.totalorder %s21, 1
      %s405 = scalar_select %p404, %s21, 1
      %s406 = smul.addr %s405, 8
      %s407 = scalar_lea.vmem %s8, %s406
      %p408 = scmp.lt.s32.totalorder %s21, 1
      %s409 = scalar_select %p408, %s21, 1
      %s410 = smul.addr %s409, 8
      %s411 = scalar_lea.vmem %s9, %s410
      %v412 = vld [vmem:[%s388] sm:$0xff]
      %v413 = vld [vmem:[%s392] sm:$0xff]
      %v414 = vld [vmem:[%s384] sm:$0x1]
      %v415 = vld [vmem:[%s3] sm:$0x1]
      %v416 = vld [vmem:[%s4] sm:$0x1]
      %v417 = vld [vmem:[%s396] sm:$0xff]
      %v418 = vld [vmem:[%s400] sm:$0xff]
      %v420 = vlaneseq
      %v421 = vshrl.u32 %v420, 7
      %v422 = vsub.s32 0, %v421
      %v423 = vrot.slane %v414, %v422
      %v425 = vadd.f32 %v412, %v423
      %427 = vset.pattern.permute.xlu0 0
      %428 = vperm.xlu0 %427, %v418
      %v429 = vpop.permute.xlu0 %428
      %v432 = vlaneseq
      %v433 = vshrl.u32 %v432, 7
      %v434 = vsub.s32 0, %v433
      %v435 = vrot.slane %v415, %v434
      %v437 = vmul.f32 %v429, %v435
      %v438 = vadd.f32 %v425, %v437
      %v439 = vtanh.pop %v438
      %v441 = vlaneseq
      %v442 = vshrl.u32 %v441, 7
      %v443 = vsub.s32 0, %v442
      %v444 = vrot.slane %v416, %v443
      %v446 = vmul.f32 %v439, %v444
      %vm447 = vcmask 523264
      %v448 = vsel %vm447, %v446, 0.0
      %449 = vadd.xlane.f32.xlu0 %v448
      %v450 = vpop.xlane.xlu0 %449
      %v451 = vrot.slane %v450, 4
      %v452 = vmax.f32 %v450, %v451
      %v453 = vrot.slane %v452, 2
      %v454 = vmax.f32 %v452, %v453
      %v455 = vrot.slane %v454, 1
      %v456 = vmax.f32 %v454, %v455
      %v457 = vsub.f32 %v450, %v456
      %v458 = vmul.f32 %v457, 1.442695
      %v459 = vpow.pop %v458
      %v460 = vrot.slane %v459, 4
      %v461 = vadd.f32 %v459, %v460
      %v462 = vrot.slane %v461, 2
      %v463 = vadd.f32 %v461, %v462
      %v464 = vrot.slane %v463, 1
      %v465 = vadd.f32 %v463, %v464
      %v466 = vrcp.pop %v465
      %v467 = vmul.f32 %v459, %v466
      %v468 = vmul.f32 %v467, %v417
      %vm469 = vcmask 7168
      %v470 = vsel %vm469, %v468, 0.0
      %v471 = vrot.slane %v470, 4
      %v472 = vadd.f32 %v470, %v471
      %v473 = vrot.slane %v472, 2
      %v474 = vadd.f32 %v472, %v473
      %v475 = vrot.slane %v474, 1
      %v476 = vadd.f32 %v474, %v475
      %v477 = vadd.f32 %v476, 1e-12
      %v478 = vrcp.pop %v477
      %v479 = vmul.f32 %v468, %v478
      %481 = vset.pattern.permute.xlu0 0
      %482 = vperm.xlu0 %481, %v479
      %v483 = vpop.permute.xlu0 %482
      %v485 = vmul.f32 %v483, %v413
      %v486 = vsel %vm447, %v485, 0.0
      %v487 = vrot.slane %v486, 4
      %v488 = vadd.f32 %v486, %v487
      %v489 = vrot.slane %v488, 2
      %v490 = vadd.f32 %v488, %v489
      %v491 = vrot.slane %v490, 1
      %v492 = vadd.f32 %v490, %v491
      %vm493 = vcmask 516096
      %494 = vst.msk [vmem:[%s403] sm:$0x1] %vm493, %v492
      %495 = vst.msk [vmem:[%s407] sm:$0xff] %vm469, %v479
      %v496 = vadd.f32 %v418, %v479
      %497 = vst.msk [vmem:[%s411] sm:$0xff] %vm469, %v496
      %p498 = scmp.lt.s32.totalorder %s21, 1
      %s499 = scalar_select %p498, %s21, 1
      %s500 = scalar_lea.vmem %s7, %s499
      %p501 = scmp.lt.s32.totalorder %s21, 1
      %s502 = scalar_select %p501, %s21, 1
      %s503 = smul.addr %s502, 8
      %s504 = scalar_lea.vmem %s8, %s503
      %p505 = scmp.lt.s32.totalorder %s21, 1
      %s506 = scalar_select %p505, %s21, 1
      %s507 = smul.addr %s506, 8
      %s508 = scalar_lea.vmem %s9, %s507
      // Predicated region
      $region49: #{decoder_forward.13} parent=47 // pred_check
        %p509 = pneg %p211
      $region50: #{decoder_forward.13} parent=47 // pred_check_branch
        %511 = sbr.rel (%p509) target = $region52
      $region51: #{decoder_forward.13} parent=47 // pred_region
        _
      $region52: #{decoder_forward.13} parent=47 // pred_fallthru
        _
      // Predicated region
      $region53: #{decoder_forward.13} parent=47 // pred_check
        %p512 = pneg %p237
      $region54: #{decoder_forward.13} parent=47 // pred_check_branch
        %514 = sbr.rel (%p512) target = $region56
      $region55: #{decoder_forward.13} parent=47 // pred_region
        _
      $region56: #{decoder_forward.13} parent=47 // pred_fallthru
        _
      // Predicated region
      $region57: #{decoder_forward.13} parent=47 // pred_check
        %p515 = pneg %p263
      $region58: #{decoder_forward.13} parent=47 // pred_check_branch
        %517 = sbr.rel (%p515) target = $region60
      $region59: #{decoder_forward.13} parent=47 // pred_region
        _
      $region60: #{decoder_forward.13} parent=47 // pred_fallthru
        _
    $region48: #{decoder_forward.13} parent=5 // pred_fallthru
      _
    %p518 = scmp.le.s32.totalorder 2, %s16
    // Predicated region
    $region61: #{decoder_forward.13} parent=5 // pred_check
      %p519 = pneg %p518
    $region62: #{decoder_forward.13} parent=5 // pred_check_branch
      %521 = sbr.rel (%p519) target = $region64
    $region63: #{decoder_forward.13} parent=5 // pred_region
      %s522 = ssub.s32 %s16, 2
      // Predicated region
      $region65: #{decoder_forward.13} parent=63 // pred_check
        %p523 = pneg %p217
      $region66: #{decoder_forward.13} parent=63 // pred_check_branch
        %525 = sbr.rel (%p523) target = $region68
      $region67: #{decoder_forward.13} parent=63 // pred_region
        %p526 = scmp.lt.s32.totalorder %s22, 1
        %s527 = scalar_select %p526, %s22, 1
        %s528 = scalar_lea.vmem %s7, %s527
      $region68: #{decoder_forward.13} parent=63 // pred_fallthru
        _
      // Predicated region
      $region69: #{decoder_forward.13} parent=63 // pred_check
        %p529 = pneg %p243
      $region70: #{decoder_forward.13} parent=63 // pred_check_branch
        %531 = sbr.rel (%p529) target = $region72
      $region71: #{decoder_forward.13} parent=63 // pred_region
        %p532 = scmp.lt.s32.totalorder %s22, 1
        %s533 = scalar_select %p532, %s22, 1
        %s534 = smul.addr %s533, 8
        %s535 = scalar_lea.vmem %s8, %s534
      $region72: #{decoder_forward.13} parent=63 // pred_fallthru
        _
      // Predicated region
      $region73: #{decoder_forward.13} parent=63 // pred_check
        %p536 = pneg %p269
      $region74: #{decoder_forward.13} parent=63 // pred_check_branch
        %538 = sbr.rel (%p536) target = $region76
      $region75: #{decoder_forward.13} parent=63 // pred_region
        %p539 = scmp.lt.s32.totalorder %s22, 1
        %s540 = scalar_select %p539, %s22, 1
        %s541 = smul.addr %s540, 8
        %s542 = scalar_lea.vmem %s9, %s541
      $region76: #{decoder_forward.13} parent=63 // pred_fallthru
        _
    $region64: #{decoder_forward.13} parent=5 // pred_fallthru
      _
  $region6: #{decoder_forward.13} parent=0 // loop_footer
    %s20 = sadd.s32 1, %s16
  $region7: #{decoder_forward.13} parent=0 // loop_footer_branch
    %15 = sbr.rel target = $region3
  $region8: #{decoder_forward.13} parent=0 // loop_exit
    _

// kernel: decoder_forward.15
$region0: #{decoder_forward.15}
  #allocation0 [shape = 'u32[]', space=smem, size = 0x4, offset = 0x4, fixed_abs, tag = 'smem constant byte address 0x4 - core index']
  #allocation1 [shape = 'u32[144,128]{1,0:T(1,128)}', space=vmem, size = 0x12000, scoped, tag = 'internal scratch']
  %s0 = inlined_call_operand.vmem [shape: f32[2,96], index: 0, kind: input, shape index: {}]
  %s1 = inlined_call_operand.vmem [shape: f32[96,32], index: 1, kind: input, shape index: {}]
  %s2 = inlined_call_operand.vmem [shape: f32[1,32], index: 2, kind: input, shape index: {}]
  %s3 = inlined_call_operand.vmem [shape: f32[2,32], index: 3, kind: output, shape index: {}]
  %s4 = sld [smem:[#allocation0]]
  $region22: #{decoder_forward.15} parent=0
    _
  %s6 = ssub.s32 1, %s4
  %s7 = scalar_select 0, %s6, %s4
  // Predicated region
  $region2: #{decoder_forward.15} parent=0 // pred_check
    _
  $region3: #{decoder_forward.15} parent=0 // pred_check_branch
    %9 = sbr.rel (0) target = $region5
  $region4: #{decoder_forward.15} parent=0 // pred_region
    _
  $region5: #{decoder_forward.15} parent=0 // pred_fallthru
    _
  // Predicated region
  $region6: #{decoder_forward.15} parent=0 // pred_check
    _
  $region7: #{decoder_forward.15} parent=0 // pred_check_branch
    %11 = sbr.rel (0) target = $region9
  $region8: #{decoder_forward.15} parent=0 // pred_region
    _
  $region9: #{decoder_forward.15} parent=0 // pred_fallthru
    _
  // Predicated region
  $region10: #{decoder_forward.15} parent=0 // pred_check
    _
  $region11: #{decoder_forward.15} parent=0 // pred_check_branch
    %13 = sbr.rel (0) target = $region13
  $region12: #{decoder_forward.15} parent=0 // pred_region
    _
  $region13: #{decoder_forward.15} parent=0 // pred_fallthru
    _
  %v14 = vld [vmem:[%s0] sm:$0x3]
  %v15 = vld [vmem:[%s1] sm:$0xff]
  %v16 = vld [vmem:[%s1 + $0x8] sm:$0xff]
  %v17 = vld [vmem:[%s1 + $0x10] sm:$0xff]
  %v18 = vld [vmem:[%s1 + $0x18] sm:$0xff]
  %v19 = vld [vmem:[%s1 + $0x20] sm:$0xff]
  %v20 = vld [vmem:[%s1 + $0x28] sm:$0xff]
  %v21 = vld [vmem:[%s1 + $0x30] sm:$0xff]
  %v22 = vld [vmem:[%s1 + $0x38] sm:$0xff]
  %v23 = vld [vmem:[%s1 + $0x40] sm:$0xff]
  %v24 = vld [vmem:[%s1 + $0x48] sm:$0xff]
  %v25 = vld [vmem:[%s1 + $0x50] sm:$0xff]
  %v26 = vld [vmem:[%s1 + $0x58] sm:$0xff]
  %v27 = vld [vmem:[%s2] sm:$0x1]
  %v29 = vlaneseq
  %v30 = vshrl.u32 %v29, 7
  %v31 = vsub.s32 0, %v30
  %v32 = vrot.slane %v27, %v31
  %vm34 = vcmask 785408
  %v36 = vsel %vm34, %v14, 0
  %38 = vmatprep.subr.mxu0 0.0
  %39 = vmatpush1.msra.mxu0 %v15
  %40 = vmatprep.subr.mxu0 0.0
  %41 = vmatpush1.msra.mxu0 %v16
  %42 = vmatprep.subr.mxu0 0.0
  %43 = vmatpush1.msra.mxu0 %v17
  %44 = vmatprep.subr.mxu0 0.0
  %45 = vmatpush1.msra.mxu0 %v18
  %46 = vmatprep.subr.mxu0 0.0
  %47 = vmatpush1.msra.mxu0 %v19
  %48 = vmatprep.subr.mxu0 0.0
  %49 = vmatpush1.msra.mxu0 %v20
  %50 = vmatprep.subr.mxu0 0.0
  %51 = vmatpush1.msra.mxu0 %v21
  %52 = vmatprep.subr.mxu0 0.0
  %53 = vmatpush1.msra.mxu0 %v22
  %54 = vmatprep.subr.mxu0 0.0
  %55 = vmatpush1.msra.mxu0 %v23
  %56 = vmatprep.subr.mxu0 0.0
  %57 = vmatpush1.msra.mxu0 %v24
  %58 = vmatprep.subr.mxu0 0.0
  %59 = vmatpush1.msra.mxu0 %v25
  %60 = vmatprep.subr.mxu0 0.0
  %61 = vmatpush1.msra.mxu0 %v26
  %62 = vmatprep.subr.mxu0 0.0
  %63 = vmatpush1.msra.mxu0 0.0
  %64 = vmatprep.subr.mxu0 0.0
  %65 = vmatpush1.msra.mxu0 0.0
  %66 = vmatprep.subr.mxu0 0.0
  %67 = vmatpush1.msra.mxu0 0.0
  %68 = vmatprep.subr.mxu0 0.0
  %69 = vmatpush1.msra.mxu0 0.0
  %70 = vmatprep.subr.mxu0 0.0
  %71 = vmatpush1.msra.mxu0 0.0
  %72 = vmatprep.subr.mxu0 0.0
  %73 = vmatpush1.msra.mxu0 0.0
  %74 = vmatprep.subr.mxu0 0.0
  %75 = vmatpush1.msra.mxu0 0.0
  %76 = vmatprep.subr.mxu0 0.0
  %77 = vmatpush1.msra.mxu0 0.0
  %78 = vmatprep.subr.mxu0 0.0
  %79 = vmatpush1.msra.mxu0 0.0
  %80 = vmatprep.subr.mxu0 0.0
  %81 = vmatpush1.msra.mxu0 0.0
  %82 = vmatprep.subr.mxu0 0.0
  %83 = vmatpush1.msra.mxu0 0.0
  %84 = vmatprep.subr.mxu0 0.0
  %85 = vmatpush1.msra.mxu0 0.0
  %86 = vmatprep.subr.mxu0 0.0
  %87 = vmatpush1.msra.mxu0 0.0
  %88 = vmatprep.subr.mxu0 0.0
  %89 = vmatpush1.msra.mxu0 0.0
  %90 = vmatprep.subr.mxu0 0.0
  %91 = vmatpush1.msra.mxu0 0.0
  %92 = vmatprep.subr.mxu0 0.0
  %93 = vmatpush1.msra.mxu0 0.0
  %94 = vmatprep.subr.mxu0 0.0
  %95 = vmatpush1.msra.mxu0 0.0
  %96 = vmatprep.subr.mxu0 0.0
  %97 = vmatpush1.msra.mxu0 0.0
  %98 = vmatprep.subr.mxu0 0.0
  %99 = vmatpush1.msra.mxu0 0.0
  %100 = vmatprep.subr.mxu0 0.0
  %101 = vmatpush1.msra.mxu0 0.0
  %102 = vmatprep.mubr.f32.mxu0 0.0
  %103 = vmatmul.mubr.f32.gmra.mrb[0].mxu0 %v36
  %v104 = vpop.f32.mrb[0].mxu0
  %v105 = vadd.f32 %v32, %v104
  %v106 = vpop.f32.mrb[0].mxu0
  %107 = vdwg.mxu0
  %vm108 = vcmask 254976
  %109 = vst.msk [vmem:[%s3] sm:$0x3] %vm108, %v105
  // Predicated region
  $region14: #{decoder_forward.15} parent=0 // pred_check
    _
  $region15: #{decoder_forward.15} parent=0 // pred_check_branch
    %111 = sbr.rel (0) target = $region17
  $region16: #{decoder_forward.15} parent=0 // pred_region
    _
  $region17: #{decoder_forward.15} parent=0 // pred_fallthru
    _
  // Predicated region
  $region18: #{decoder_forward.15} parent=0 // pred_check
    _
  $region19: #{decoder_forward.15} parent=0 // pred_check_branch
    %113 = sbr.rel (0) target = $region21
  $region20: #{decoder_forward.15} parent=0 // pred_region
    _
  $region21: #{decoder_forward.15} parent=0 // pred_fallthru
    _

// kernel: decoder_forward.16
$region0: #{decoder_forward.16}
  #allocation0 [shape = 'u32[]', space=smem, size = 0x4, offset = 0x4, fixed_abs, tag = 'smem constant byte address 0x4 - core index']
  #allocation1 [shape = 'u32[144,128]{1,0:T(1,128)}', space=vmem, size = 0x12000, scoped, tag = 'internal scratch']
  %s0 = inlined_call_operand.vmem [shape: f32[2,32], index: 0, kind: input, shape index: {}]
  %s1 = inlined_call_operand.vmem [shape: f32[32,50], index: 1, kind: input, shape index: {}]
  %s2 = inlined_call_operand.vmem [shape: f32[1,50], index: 2, kind: input, shape index: {}]
  %s3 = inlined_call_operand.vmem [shape: f32[2,50], index: 3, kind: output, shape index: {}]
  %s4 = sld [smem:[#allocation0]]
  $region22: #{decoder_forward.16} parent=0
    _
  %s6 = ssub.s32 1, %s4
  %s7 = scalar_select 0, %s6, %s4
  // Predicated region
  $region2: #{decoder_forward.16} parent=0 // pred_check
    _
  $region3: #{decoder_forward.16} parent=0 // pred_check_branch
    %9 = sbr.rel (0) target = $region5
  $region4: #{decoder_forward.16} parent=0 // pred_region
    _
  $region5: #{decoder_forward.16} parent=0 // pred_fallthru
    _
  // Predicated region
  $region6: #{decoder_forward.16} parent=0 // pred_check
    _
  $region7: #{decoder_forward.16} parent=0 // pred_check_branch
    %11 = sbr.rel (0) target = $region9
  $region8: #{decoder_forward.16} parent=0 // pred_region
    _
  $region9: #{decoder_forward.16} parent=0 // pred_fallthru
    _
  // Predicated region
  $region10: #{decoder_forward.16} parent=0 // pred_check
    _
  $region11: #{decoder_forward.16} parent=0 // pred_check_branch
    %13 = sbr.rel (0) target = $region13
  $region12: #{decoder_forward.16} parent=0 // pred_region
    _
  $region13: #{decoder_forward.16} parent=0 // pred_fallthru
    _
  %v14 = vld [vmem:[%s0] sm:$0x3]
  %v15 = vld [vmem:[%s1] sm:$0xff]
  %v16 = vld [vmem:[%s1 + $0x8] sm:$0xff]
  %v17 = vld [vmem:[%s1 + $0x10] sm:$0xff]
  %v18 = vld [vmem:[%s1 + $0x18] sm:$0xff]
  %v19 = vld [vmem:[%s2] sm:$0x1]
  %v21 = vlaneseq
  %v22 = vshrl.u32 %v21, 7
  %v23 = vsub.s32 0, %v22
  %v24 = vrot.slane %v19, %v23
  %vm26 = vcmask 261120
  %v28 = vsel %vm26, %v14, 0
  %30 = vmatprep.subr.mxu0 0.0
  %31 = vmatpush1.msra.mxu0 %v15
  %32 = vmatprep.subr.mxu0 0.0
  %33 = vmatpush1.msra.mxu0 %v16
  %34 = vmatprep.subr.mxu0 0.0
  %35 = vmatpush1.msra.mxu0 %v17
  %36 = vmatprep.subr.mxu0 0.0
  %37 = vmatpush1.msra.mxu0 %v18
  %38 = vmatprep.subr.mxu0 0.0
  %39 = vmatpush1.msra.mxu0 0.0
  %40 = vmatprep.subr.mxu0 0.0
  %41 = vmatpush1.msra.mxu0 0.0
  %42 = vmatprep.subr.mxu0 0.0
  %43 = vmatpush1.msra.mxu0 0.0
  %44 = vmatprep.subr.mxu0 0.0
  %45 = vmatpush1.msra.mxu0 0.0
  %46 = vmatprep.subr.mxu0 0.0
  %47 = vmatpush1.msra.mxu0 0.0
  %48 = vmatprep.subr.mxu0 0.0
  %49 = vmatpush1.msra.mxu0 0.0
  %50 = vmatprep.subr.mxu0 0.0
  %51 = vmatpush1.msra.mxu0 0.0
  %52 = vmatprep.subr.mxu0 0.0
  %53 = vmatpush1.msra.mxu0 0.0
  %54 = vmatprep.subr.mxu0 0.0
  %55 = vmatpush1.msra.mxu0 0.0
  %56 = vmatprep.subr.mxu0 0.0
  %57 = vmatpush1.msra.mxu0 0.0
  %58 = vmatprep.subr.mxu0 0.0
  %59 = vmatpush1.msra.mxu0 0.0
  %60 = vmatprep.subr.mxu0 0.0
  %61 = vmatpush1.msra.mxu0 0.0
  %62 = vmatprep.subr.mxu0 0.0
  %63 = vmatpush1.msra.mxu0 0.0
  %64 = vmatprep.subr.mxu0 0.0
  %65 = vmatpush1.msra.mxu0 0.0
  %66 = vmatprep.subr.mxu0 0.0
  %67 = vmatpush1.msra.mxu0 0.0
  %68 = vmatprep.subr.mxu0 0.0
  %69 = vmatpush1.msra.mxu0 0.0
  %70 = vmatprep.subr.mxu0 0.0
  %71 = vmatpush1.msra.mxu0 0.0
  %72 = vmatprep.subr.mxu0 0.0
  %73 = vmatpush1.msra.mxu0 0.0
  %74 = vmatprep.subr.mxu0 0.0
  %75 = vmatpush1.msra.mxu0 0.0
  %76 = vmatprep.subr.mxu0 0.0
  %77 = vmatpush1.msra.mxu0 0.0
  %78 = vmatprep.subr.mxu0 0.0
  %79 = vmatpush1.msra.mxu0 0.0
  %80 = vmatprep.subr.mxu0 0.0
  %81 = vmatpush1.msra.mxu0 0.0
  %82 = vmatprep.subr.mxu0 0.0
  %83 = vmatpush1.msra.mxu0 0.0
  %84 = vmatprep.subr.mxu0 0.0
  %85 = vmatpush1.msra.mxu0 0.0
  %86 = vmatprep.subr.mxu0 0.0
  %87 = vmatpush1.msra.mxu0 0.0
  %88 = vmatprep.subr.mxu0 0.0
  %89 = vmatpush1.msra.mxu0 0.0
  %90 = vmatprep.subr.mxu0 0.0
  %91 = vmatpush1.msra.mxu0 0.0
  %92 = vmatprep.subr.mxu0 0.0
  %93 = vmatpush1.msra.mxu0 0.0
  %94 = vmatprep.mubr.f32.mxu0 0.0
  %95 = vmatmul.mubr.f32.gmra.mrb[0].mxu0 %v28
  %v96 = vpop.f32.mrb[0].mxu0
  %v97 = vadd.f32 %v24, %v96
  %v98 = vpop.f32.mrb[0].mxu0
  %99 = vdwg.mxu0
  %vm100 = vcmask 402432
  %101 = vst.msk [vmem:[%s3] sm:$0x3] %vm100, %v97
  // Predicated region
  $region14: #{decoder_forward.16} parent=0 // pred_check
    _
  $region15: #{decoder_forward.16} parent=0 // pred_check_branch
    %103 = sbr.rel (0) target = $region17
  $region16: #{decoder_forward.16} parent=0 // pred_region
    _
  $region17: #{decoder_forward.16} parent=0 // pred_fallthru
    _
  // Predicated region
  $region18: #{decoder_forward.16} parent=0 // pred_check
    _
  $region19: #{decoder_forward.16} parent=0 // pred_check_branch
    %105 = sbr.rel (0) target = $region21
  $region20: #{decoder_forward.16} parent=0 // pred_region
    _
  $region21: #{decoder_forward.16} parent=0 // pred_fallthru
    _

// kernel: decoder_forward.12
$region0: #{decoder_forward.12}
  #allocation0 [shape = 'u32[]', space=smem, size = 0x4, offset = 0x4, fixed_abs, tag = 'smem constant byte address 0x4 - core index']
  #allocation1 [shape = 'u32[144,128]{1,0:T(1,128)}', space=vmem, size = 0x12000, scoped, tag = 'internal scratch']
  %s0 = inlined_call_operand.vmem [shape: f32[2,64], index: 0, kind: input, shape index: {}]
  %s1 = inlined_call_operand.vmem [shape: f32[64,64], index: 1, kind: input, shape index: {}]
  %s2 = inlined_call_operand.vmem [shape: f32[1,64], index: 2, kind: input, shape index: {}]
  %s3 = inlined_call_operand.vmem [shape: f32[2,64], index: 3, kind: output, shape index: {}]
  %s4 = sld [smem:[#allocation0]]
  $region22: #{decoder_forward.12} parent=0
    _
  %s6 = ssub.s32 1, %s4
  %s7 = scalar_select 0, %s6, %s4
  // Predicated region
  $region2: #{decoder_forward.12} parent=0 // pred_check
    _
  $region3: #{decoder_forward.12} parent=0 // pred_check_branch
    %9 = sbr.rel (0) target = $region5
  $region4: #{decoder_forward.12} parent=0 // pred_region
    _
  $region5: #{decoder_forward.12} parent=0 // pred_fallthru
    _
  // Predicated region
  $region6: #{decoder_forward.12} parent=0 // pred_check
    _
  $region7: #{decoder_forward.12} parent=0 // pred_check_branch
    %11 = sbr.rel (0) target = $region9
  $region8: #{decoder_forward.12} parent=0 // pred_region
    _
  $region9: #{decoder_forward.12} parent=0 // pred_fallthru
    _
  // Predicated region
  $region10: #{decoder_forward.12} parent=0 // pred_check
    _
  $region11: #{decoder_forward.12} parent=0 // pred_check_branch
    %13 = sbr.rel (0) target = $region13
  $region12: #{decoder_forward.12} parent=0 // pred_region
    _
  $region13: #{decoder_forward.12} parent=0 // pred_fallthru
    _
  %v14 = vld [vmem:[%s0] sm:$0x3]
  %v15 = vld [vmem:[%s1] sm:$0xff]
  %v16 = vld [vmem:[%s1 + $0x8] sm:$0xff]
  %v17 = vld [vmem:[%s1 + $0x10] sm:$0xff]
  %v18 = vld [vmem:[%s1 + $0x18] sm:$0xff]
  %v19 = vld [vmem:[%s1 + $0x20] sm:$0xff]
  %v20 = vld [vmem:[%s1 + $0x28] sm:$0xff]
  %v21 = vld [vmem:[%s1 + $0x30] sm:$0xff]
  %v22 = vld [vmem:[%s1 + $0x38] sm:$0xff]
  %v23 = vld [vmem:[%s2] sm:$0x1]
  %v25 = vlaneseq
  %v26 = vshrl.u32 %v25, 7
  %v27 = vsub.s32 0, %v26
  %v28 = vrot.slane %v23, %v27
  %vm30 = vcmask 523264
  %v32 = vsel %vm30, %v14, 0
  %34 = vmatprep.subr.mxu0 0.0
  %35 = vmatpush1.msra.mxu0 %v15
  %36 = vmatprep.subr.mxu0 0.0
  %37 = vmatpush1.msra.mxu0 %v16
  %38 = vmatprep.subr.mxu0 0.0
  %39 = vmatpush1.msra.mxu0 %v17
  %40 = vmatprep.subr.mxu0 0.0
  %41 = vmatpush1.msra.mxu0 %v18
  %42 = vmatprep.subr.mxu0 0.0
  %43 = vmatpush1.msra.mxu0 %v19
  %44 = vmatprep.subr.mxu0 0.0
  %45 = vmatpush1.msra.mxu0 %v20
  %46 = vmatprep.subr.mxu0 0.0
  %47 = vmatpush1.msra.mxu0 %v21
  %48 = vmatprep.subr.mxu0 0.0
  %49 = vmatpush1.msra.mxu0 %v22
  %50 = vmatprep.subr.mxu0 0.0
  %51 = vmatpush1.msra.mxu0 0.0
  %52 = vmatprep.subr.mxu0 0.0
  %53 = vmatpush1.msra.mxu0 0.0
  %54 = vmatprep.subr.mxu0 0.0
  %55 = vmatpush1.msra.mxu0 0.0
  %56 = vmatprep.subr.mxu0 0.0
  %57 = vmatpush1.msra.mxu0 0.0
  %58 = vmatprep.subr.mxu0 0.0
  %59 = vmatpush1.msra.mxu0 0.0
  %60 = vmatprep.subr.mxu0 0.0
  %61 = vmatpush1.msra.mxu0 0.0
  %62 = vmatprep.subr.mxu0 0.0
  %63 = vmatpush1.msra.mxu0 0.0
  %64 = vmatprep.subr.mxu0 0.0
  %65 = vmatpush1.msra.mxu0 0.0
  %66 = vmatprep.subr.mxu0 0.0
  %67 = vmatpush1.msra.mxu0 0.0
  %68 = vmatprep.subr.mxu0 0.0
  %69 = vmatpush1.msra.mxu0 0.0
  %70 = vmatprep.subr.mxu0 0.0
  %71 = vmatpush1.msra.mxu0 0.0
  %72 = vmatprep.subr.mxu0 0.0
  %73 = vmatpush1.msra.mxu0 0.0
  %74 = vmatprep.subr.mxu0 0.0
  %75 = vmatpush1.msra.mxu0 0.0
  %76 = vmatprep.subr.mxu0 0.0
  %77 = vmatpush1.msra.mxu0 0.0
  %78 = vmatprep.subr.mxu0 0.0
  %79 = vmatpush1.msra.mxu0 0.0
  %80 = vmatprep.subr.mxu0 0.0
  %81 = vmatpush1.msra.mxu0 0.0
  %82 = vmatprep.subr.mxu0 0.0
  %83 = vmatpush1.msra.mxu0 0.0
  %84 = vmatprep.subr.mxu0 0.0
  %85 = vmatpush1.msra.mxu0 0.0
  %86 = vmatprep.subr.mxu0 0.0
  %87 = vmatpush1.msra.mxu0 0.0
  %88 = vmatprep.subr.mxu0 0.0
  %89 = vmatpush1.msra.mxu0 0.0
  %90 = vmatprep.subr.mxu0 0.0
  %91 = vmatpush1.msra.mxu0 0.0
  %92 = vmatprep.subr.mxu0 0.0
  %93 = vmatpush1.msra.mxu0 0.0
  %94 = vmatprep.subr.mxu0 0.0
  %95 = vmatpush1.msra.mxu0 0.0
  %96 = vmatprep.subr.mxu0 0.0
  %97 = vmatpush1.msra.mxu0 0.0
  %98 = vmatprep.mubr.f32.mxu0 0.0
  %99 = vmatmul.mubr.f32.gmra.mrb[0].mxu0 %v32
  %v100 = vpop.f32.mrb[0].mxu0
  %v101 = vadd.f32 %v28, %v100
  %v102 = vpop.f32.mrb[0].mxu0
  %103 = vdwg.mxu0
  %vm104 = vcmask 517120
  %105 = vst.msk [vmem:[%s3] sm:$0x3] %vm104, %v101
  // Predicated region
  $region14: #{decoder_forward.12} parent=0 // pred_check
    _
  $region15: #{decoder_forward.12} parent=0 // pred_check_branch
    %107 = sbr.rel (0) target = $region17
  $region16: #{decoder_forward.12} parent=0 // pred_region
    _
  $region17: #{decoder_forward.12} parent=0 // pred_fallthru
    _
  // Predicated region
  $region18: #{decoder_forward.12} parent=0 // pred_check
    _
  $region19: #{decoder_forward.12} parent=0 // pred_check_branch
    %109 = sbr.rel (0) target = $region21
  $region20: #{decoder_forward.12} parent=0 // pred_region
    _
  $region21: #{decoder_forward.12} parent=0 // pred_fallthru
    _

// kernel: decoder_forward.14
$region0: #{decoder_forward.14}
  #allocation0 [shape = 'u32[]', space=smem, size = 0x4, offset = 0x4, fixed_abs, tag = 'smem constant byte address 0x4 - core index']
  #allocation1 [shape = 'u32[144,128]{1,0:T(1,128)}', space=vmem, size = 0x12000, scoped, tag = 'internal scratch']
  #allocation2 [shape = 'f32[1,1]{1,0:T(1,128)S(1)}', space=vmem, size = 0x200, scoped, tag = 'scoped memory for decoder_forward.14']
  %s0 = inlined_call_operand.vmem [shape: f32[2,144], index: 0, kind: input, shape index: {}]
  %s1 = inlined_call_operand.vmem [shape: f32[144,1], index: 1, kind: input, shape index: {}]
  %s2 = inlined_call_operand.<no memory space> [shape: f32[1,1], index: 2, kind: input, shape index: {}]
  %s3 = inlined_call_operand.vmem [shape: f32[2,1], index: 3, kind: output, shape index: {}]
  %s4 = sld [smem:[#allocation0]]
  $region22: #{decoder_forward.14} parent=0
    _
  %s6 = ssub.s32 1, %s4
  %s7 = scalar_select 0, %s6, %s4
  %v8 = vstv %s2
  %9 = vst [vmem:[#allocation2] sm:$0x1] %v8
  // Predicated region
  $region2: #{decoder_forward.14} parent=0 // pred_check
    _
  $region3: #{decoder_forward.14} parent=0 // pred_check_branch
    %11 = sbr.rel (0) target = $region5
  $region4: #{decoder_forward.14} parent=0 // pred_region
    _
  $region5: #{decoder_forward.14} parent=0 // pred_fallthru
    _
  // Predicated region
  $region6: #{decoder_forward.14} parent=0 // pred_check
    _
  $region7: #{decoder_forward.14} parent=0 // pred_check_branch
    %13 = sbr.rel (0) target = $region9
  $region8: #{decoder_forward.14} parent=0 // pred_region
    _
  $region9: #{decoder_forward.14} parent=0 // pred_fallthru
    _
  // Predicated region
  $region10: #{decoder_forward.14} parent=0 // pred_check
    _
  $region11: #{decoder_forward.14} parent=0 // pred_check_branch
    %15 = sbr.rel (0) target = $region13
  $region12: #{decoder_forward.14} parent=0 // pred_region
    _
  $region13: #{decoder_forward.14} parent=0 // pred_fallthru
    _
  %v16 = vld [vmem:[%s0] sm:$0xf]
  %v17 = vld [vmem:[%s1] sm:$0xff]
  %v18 = vld [vmem:[%s1 + $0x8] sm:$0xff]
  %v19 = vld [vmem:[%s1 + $0x10] sm:$0xff]
  %v20 = vld [vmem:[%s1 + $0x18] sm:$0xff]
  %v21 = vld [vmem:[%s1 + $0x20] sm:$0xff]
  %v22 = vld [vmem:[%s1 + $0x28] sm:$0xff]
  %v23 = vld [vmem:[%s1 + $0x30] sm:$0xff]
  %v24 = vld [vmem:[%s1 + $0x38] sm:$0xff]
  %v25 = vld [vmem:[%s1 + $0x40] sm:$0xff]
  %v26 = vld [vmem:[%s1 + $0x48] sm:$0xff]
  %v27 = vld [vmem:[%s1 + $0x50] sm:$0xff]
  %v28 = vld [vmem:[%s1 + $0x58] sm:$0xff]
  %v29 = vld [vmem:[%s1 + $0x60] sm:$0xff]
  %v30 = vld [vmem:[%s1 + $0x68] sm:$0xff]
  %v31 = vld [vmem:[%s1 + $0x70] sm:$0xff]
  %v32 = vld [vmem:[%s1 + $0x78] sm:$0xff]
  %v33 = vld [vmem:[%s1 + $0x80] sm:$0xff]
  %v34 = vld [vmem:[%s1 + $0x88] sm:$0xff]
  %v35 = vld [vmem:[#allocation2] sm:$0x1]
  %v37 = vlaneseq
  %v38 = vshrl.u32 %v37, 7
  %v39 = vsub.s32 0, %v38
  %v40 = vrot.slane %v35, %v39
  %v44 = vunpack.c.l.s4 1983009808
  %v45 = vunpack.c.0.s8 %v44
  %v46 = vlaneseq
  %v47 = vshrl.u32 %v46, 7
  %v48 = vsub.s32 %v45, %v47
  %v49 = vrot.slane %v16, %v48
  %v50 = vcombine.high %v49, %v49
  %vm52 = vcmask 130048
  %v53 = vsel %vm52, %v50, 0
  %55 = vmatprep.subr.mxu0 0.0
  %56 = vmatpush1.msra.mxu0 %v17
  %57 = vmatprep.subr.mxu0 0.0
  %58 = vmatpush1.msra.mxu0 %v18
  %59 = vmatprep.subr.mxu0 0.0
  %60 = vmatpush1.msra.mxu0 %v19
  %61 = vmatprep.subr.mxu0 0.0
  %62 = vmatpush1.msra.mxu0 %v20
  %63 = vmatprep.subr.mxu0 0.0
  %64 = vmatpush1.msra.mxu0 %v21
  %65 = vmatprep.subr.mxu0 0.0
  %66 = vmatpush1.msra.mxu0 %v22
  %67 = vmatprep.subr.mxu0 0.0
  %68 = vmatpush1.msra.mxu0 %v23
  %69 = vmatprep.subr.mxu0 0.0
  %70 = vmatpush1.msra.mxu0 %v24
  %71 = vmatprep.subr.mxu0 0.0
  %72 = vmatpush1.msra.mxu0 %v25
  %73 = vmatprep.subr.mxu0 0.0
  %74 = vmatpush1.msra.mxu0 %v26
  %75 = vmatprep.subr.mxu0 0.0
  %76 = vmatpush1.msra.mxu0 %v27
  %77 = vmatprep.subr.mxu0 0.0
  %78 = vmatpush1.msra.mxu0 %v28
  %79 = vmatprep.subr.mxu0 0.0
  %80 = vmatpush1.msra.mxu0 %v29
  %81 = vmatprep.subr.mxu0 0.0
  %82 = vmatpush1.msra.mxu0 %v30
  %83 = vmatprep.subr.mxu0 0.0
  %84 = vmatpush1.msra.mxu0 %v31
  %85 = vmatprep.subr.mxu0 0.0
  %86 = vmatpush1.msra.mxu0 %v32
  %87 = vmatprep.subr.mxu0 0.0
  %88 = vmatpush1.msra.mxu0 %v33
  %89 = vmatprep.subr.mxu0 0.0
  %90 = vmatpush1.msra.mxu0 %v34
  %91 = vmatprep.subr.mxu0 0.0
  %92 = vmatpush1.msra.mxu0 0.0
  %93 = vmatprep.subr.mxu0 0.0
  %94 = vmatpush1.msra.mxu0 0.0
  %95 = vmatprep.subr.mxu0 0.0
  %96 = vmatpush1.msra.mxu0 0.0
  %97 = vmatprep.subr.mxu0 0.0
  %98 = vmatpush1.msra.mxu0 0.0
  %99 = vmatprep.subr.mxu0 0.0
  %100 = vmatpush1.msra.mxu0 0.0
  %101 = vmatprep.subr.mxu0 0.0
  %102 = vmatpush1.msra.mxu0 0.0
  %103 = vmatprep.subr.mxu0 0.0
  %104 = vmatpush1.msra.mxu0 0.0
  %105 = vmatprep.subr.mxu0 0.0
  %106 = vmatpush1.msra.mxu0 0.0
  %107 = vmatprep.subr.mxu0 0.0
  %108 = vmatpush1.msra.mxu0 0.0
  %109 = vmatprep.subr.mxu0 0.0
  %110 = vmatpush1.msra.mxu0 0.0
  %111 = vmatprep.subr.mxu0 0.0
  %112 = vmatpush1.msra.mxu0 0.0
  %113 = vmatprep.subr.mxu0 0.0
  %114 = vmatpush1.msra.mxu0 0.0
  %115 = vmatprep.subr.mxu0 0.0
  %116 = vmatpush1.msra.mxu0 0.0
  %117 = vmatprep.subr.mxu0 0.0
  %118 = vmatpush1.msra.mxu0 0.0
  %119 = vmatprep.mubr.f32.mxu0 %v53
  %120 = vmatmul.mubr.f32.gmra.mrb[0].mxu0 %v49
  %v121 = vpop.f32.mrb[0].mxu0
  %v122 = vadd.f32 %v40, %v121
  %v123 = vpop.f32.mrb[0].mxu0
  %124 = vdwg.mxu0
  %v125 = vsub.f32 0.0, %v122
  %v126 = vmul.f32 %v125, 1.442695
  %v127 = vpow.pop %v126
  %v128 = vadd.f32 %v127, 1.0
  %v129 = vrcp.pop %v128
  %v130 = vmul.f32 1.0, %v129
  %vm131 = vcmask 1024
  %132 = vst.msk [vmem:[%s3] sm:$0x3] %vm131, %v130
  // Predicated region
  $region14: #{decoder_forward.14} parent=0 // pred_check
    _
  $region15: #{decoder_forward.14} parent=0 // pred_check_branch
    %134 = sbr.rel (0) target = $region17
  $region16: #{decoder_forward.14} parent=0 // pred_region
    _
  $region17: #{decoder_forward.14} parent=0 // pred_fallthru
    _
  // Predicated region
  $region18: #{decoder_forward.14} parent=0 // pred_check
    _
  $region19: #{decoder_forward.14} parent=0 // pred_check_branch
    %136 = sbr.rel (0) target = $region21
  $region20: #{decoder_forward.14} parent=0 // pred_region
    _
  $region21: #{decoder_forward.14} parent=0 // pred_fallthru
    _

// kernel: decoder_forward.17
$region0: #{decoder_forward.17}
  #allocation0 [shape = 'u32[]', space=smem, size = 0x4, offset = 0x4, fixed_abs, tag = 'smem constant byte address 0x4 - core index']
  #allocation1 [shape = 'u32[144,128]{1,0:T(1,128)}', space=vmem, size = 0x12000, scoped, tag = 'internal scratch']
  %s0 = inlined_call_operand.vmem [shape: f32[2,50], index: 0, kind: input, shape index: {}]
  %s1 = inlined_call_operand.vmem [shape: f32[2,1], index: 1, kind: input, shape index: {}]
  %s2 = inlined_call_operand.vmem [shape: f32[2,8], index: 2, kind: input, shape index: {}]
  %s3 = inlined_call_operand.vmem [shape: s32[2,8], index: 3, kind: input, shape index: {}]
  %s4 = inlined_call_operand.hbm [shape: f32[2,50], index: 4, kind: output, shape index: {}]
  %s5 = sld [smem:[#allocation0]]
  $region26: #{decoder_forward.17} parent=0
    _
  %s7 = ssub.s32 1, %s5
  %s8 = scalar_select 0, %s7, %s5
  $region1: #{decoder_forward.17} parent=0
    #allocation2 [shape = 'u8[1024]{0}', space=vmem, size = 0x400, scoped, tag = 'output window, operand 0, single buffered']
    #allocation3 [shape = 's32[1]{0}', space=sflag, size = 0x4, scoped, tag = 'scoped memory for decoder_forward.17']
    %9 = vsyncpa [#allocation3], 0
    // Predicated region
    $region2: #{decoder_forward.17} parent=1 // pred_check
      _
    $region3: #{decoder_forward.17} parent=1 // pred_check_branch
      %11 = sbr.rel (0) target = $region5
    $region4: #{decoder_forward.17} parent=1 // pred_region
      _
    $region5: #{decoder_forward.17} parent=1 // pred_fallthru
      _
    // Predicated region
    $region6: #{decoder_forward.17} parent=1 // pred_check
      _
    $region7: #{decoder_forward.17} parent=1 // pred_check_branch
      %13 = sbr.rel (0) target = $region9
    $region8: #{decoder_forward.17} parent=1 // pred_region
      _
    $region9: #{decoder_forward.17} parent=1 // pred_fallthru
      _
    // Predicated region
    $region10: #{decoder_forward.17} parent=1 // pred_check
      _
    $region11: #{decoder_forward.17} parent=1 // pred_check_branch
      %15 = sbr.rel (0) target = $region13
    $region12: #{decoder_forward.17} parent=1 // pred_region
      _
    $region13: #{decoder_forward.17} parent=1 // pred_fallthru
      _
    // Predicated region
    $region14: #{decoder_forward.17} parent=1 // pred_check
      _
    $region15: #{decoder_forward.17} parent=1 // pred_check_branch
      %17 = sbr.rel (0) target = $region17
    $region16: #{decoder_forward.17} parent=1 // pred_region
      _
    $region17: #{decoder_forward.17} parent=1 // pred_fallthru
      _
    %v18 = vld [vmem:[%s0] sm:$0x3]
    %vm19 = vcmask 402432
    %v20 = vsel %vm19, %v18, -inf
    %21 = vmax.xlane.f32.xlu0 %v20
    %v22 = vpop.xlane.xlu0 %21
    %v23 = vsub.f32 %v18, %v22
    %v24 = vmul.f32 %v23, 1.442695
    %v25 = vpow.pop %v24
    %v26 = vsel %vm19, %v25, 0.0
    %27 = vadd.xlane.f32.xlu0 %v26
    %v28 = vpop.xlane.xlu0 %27
    %v29 = vrcp.pop %v28
    %v30 = vmul.f32 %v25, %v29
    %v31 = vld [vmem:[%s1] sm:$0x3]
    %v32 = vld [vmem:[%s2] sm:$0x3]
    %v33 = vsub.f32 1.0, %v31
    %35 = vset.pattern.permute.xlu0 0
    %36 = vperm.xlu0 %35, %v33
    %v37 = vpop.permute.xlu0 %36
    %v39 = vmul.f32 %v32, %v37
    %v40 = vld [vmem:[%s3] sm:$0x3]
    %v41 = vlaneseq
    %v42 = vand.u32 %v41, 127
    %v43 = vlaneseq
    %v44 = vshrl.u32 %v43, 7
    %v45 = vsub.s32 0, %v44
    %v46 = vrot.slane %v40, %v45
    %48 = vbcast.lane.b32.xlu0 %v46, 256
    %v49 = vpop.permute.xlu0 %48
    %v50 = vlaneseq
    %v51 = vshrl.u32 %v50, 7
    %v52 = vsub.s32 1, %v51
    %v53 = vrot.slane %v40, %v52
    %55 = vbcast.lane.b32.xlu0 %v53, 256
    %v56 = vpop.permute.xlu0 %55
    %vm57 = vcmp.eq.s32.totalorder %v42, %v49
    %vm58 = vcmp.eq.s32.totalorder %v42, %v56
    %v59 = vsel %vm57, 1, 0
    %v60 = vsel %vm58, 1, 0
    %v61 = vcvt.s32.f32 %v59
    %v62 = vcvt.s32.f32 %v60
    %v63 = vlaneseq
    %v64 = vshrl.u32 %v63, 7
    %v65 = vsub.s32 0, %v64
    %v66 = vrot.slane %v39, %v65
    %68 = vbcast.lane.b32.xlu0 %v66, 256
    %v69 = vpop.permute.xlu0 %68
    %v70 = vlaneseq
    %v71 = vshrl.u32 %v70, 7
    %v72 = vsub.s32 1, %v71
    %v73 = vrot.slane %v39, %v72
    %75 = vbcast.lane.b32.xlu0 %v73, 256
    %v76 = vpop.permute.xlu0 %75
    %v77 = vmul.f32 %v69, %v61
    %v78 = vmul.f32 %v76, %v62
    %vm79 = vcmask 408576
    %v80 = vsel %vm79, %v77, 0.0
    %v81 = vrot.slane %v80, 4
    %v82 = vadd.f32 %v80, %v81
    %v83 = vrot.slane %v82, 2
    %v84 = vadd.f32 %v82, %v83
    %v85 = vrot.slane %v84, 1
    %v86 = vadd.f32 %v84, %v85
    %v87 = vsel %vm79, %v78, 0.0
    %v88 = vrot.slane %v87, 4
    %v89 = vadd.f32 %v87, %v88
    %v90 = vrot.slane %v89, 2
    %v91 = vadd.f32 %v89, %v90
    %v92 = vrot.slane %v91, 1
    %v93 = vadd.f32 %v91, %v92
    %95 = vset.pattern.permute.xlu0 0
    %96 = vperm.xlu0 %95, %v31
    %v97 = vpop.permute.xlu0 %96
    %v99 = vmul.f32 %v97, %v30
    %vm102 = vcmask 1041409
    %v103 = vsel %vm102, %v93, %v86
    %v105 = vadd.f32 %v99, %v103
    %106 = vst.msk [vmem:[#allocation2] sm:$0x3] %vm19, %v105
    // Predicated region
    $region18: #{decoder_forward.17} parent=1 // pred_check
      _
    $region19: #{decoder_forward.17} parent=1 // pred_check_branch
      %108 = sbr.rel (0) target = $region21
    $region20: #{decoder_forward.17} parent=1 // pred_region
      %s110 = ssub.s32 32, 32
      %111 = vsyncadd [#allocation3], %s110
      %s113 = sshll.u32 [#allocation2], 4
      %s114 = int_to_ptr.vmem [resolvable:$true] %s113
      %116 = dma.vmem_to_hbm [thread:$0]  %s114, 32, %s4, [#allocation3]
    $region21: #{decoder_forward.17} parent=1 // pred_fallthru
      _
    // Predicated region
    $region22: #{decoder_forward.17} parent=1 // pred_check
      _
    $region23: #{decoder_forward.17} parent=1 // pred_check_branch
      %118 = sbr.rel (0) target = $region25
    $region24: #{decoder_forward.17} parent=1 // pred_region
      %119 = dma.done [#allocation3], 32
    $region25: #{decoder_forward.17} parent=1 // pred_fallthru
      _
    %120 = vsyncpa [#allocation3], 1

</llo_original>
